<compile_context>
chip_gen: v7x
topology: tpu7x:2x2x1
jax: 0.10.0
libtpu: 0.0.40
codegen_flags: <defaults>
</compile_context>

<pallas_src>
import jax
import jax.numpy as jnp
from jax.experimental import pallas as pl
from jax.experimental.pallas import tpu as pltpu


HIDDEN = 256


def _round_up(x, m):
    return ((x + m - 1) // m) * m


def _critic_kernel(sa_ref, w14_ref, b14_ref, w2_ref, b2_ref, w5_ref, b5_ref,
                   w3p_ref, w6p_ref, b36_ref, qt_ref):
    """Feature-major fused two-head MLP; batch is on the lane axis."""
    cdt = w14_ref.dtype            # MXU input dtype (bf16); accumulation is f32.
    sa = sa_ref[...].astype(cdt)   # (in_dim, TB)

    # Layer 1 of both heads in one matmul: rows [0:256] -> Q1, [256:512] -> Q2.
    h = jnp.dot(w14_ref[...], sa, preferred_element_type=jnp.float32) + b14_ref[...]
    h = jnp.maximum(h, 0.0)        # (512, TB) f32 ReLU (v5e-safe)

    h1 = h[:HIDDEN].astype(cdt)    # static, sublane-aligned slices
    h2 = h[HIDDEN:].astype(cdt)

    # Layer 2: one (256,256) x (256,TB) matmul per head (MXU-shape optimal).
    g1 = jnp.maximum(
        jnp.dot(w2_ref[...], h1, preferred_element_type=jnp.float32) + b2_ref[...], 0.0)
    g2 = jnp.maximum(
        jnp.dot(w5_ref[...], h2, preferred_element_type=jnp.float32) + b5_ref[...], 0.0)

    # Layer 3: w3p has Q1's weights in row 0 (row 1 zero), w6p has Q2's in
    # row 1 (row 0 zero), so the sum assembles (2, TB) directly — no concat,
    # and the store below is a full, lane-dense tile.
    qt = (jnp.dot(w3p_ref[...], g1.astype(cdt), preferred_element_type=jnp.float32)
          + jnp.dot(w6p_ref[...], g2.astype(cdt), preferred_element_type=jnp.float32)
          + b36_ref[...])           # (2, TB)
    qt_ref[...] = qt.astype(qt_ref.dtype)


def critic_forward(state, action, params, *, block_b=1024):
    """Fused TD3-BC Critic.forward.  Returns (q1, q2), each (B, 1) float32."""
    B, state_dim = state.shape
    action_dim = action.shape[1]
    in_dim = state_dim + action_dim
    p = params

    # Lane-dense input slab (in_dim, B): concat + transpose in the wrapper
    # costs ~64 B/row of HBM and makes layer 1 a single matmul.
    sa_t = jnp.concatenate([state, action], axis=1).T

    # Tile selection: for B > 128 use at least two 128-granular tiles so the
    # "parallel" grid axis gives v7x's second TensorCore real work; tiny
    # batches use one 8-aligned tile.
    if B > 128:
        TB = min(block_b, _round_up(pl.cdiv(B, 2), 128))
    else:
        TB = _round_up(B, 8)
    Bp = pl.cdiv(B, TB) * TB
    if Bp != B:
        sa_t = jnp.pad(sa_t, ((0, 0), (0, Bp - B)))  # padded columns sliced off below

    grid = (Bp // TB,)
    const = lambda i: (0, 0)  # weights/biases: same block every step (VMEM-resident)

    in_specs = [
        pl.BlockSpec((in_dim, TB), lambda i: (0, i)),
        pl.BlockSpec(p["w14"].shape, const),
        pl.BlockSpec(p["b14"].shape, const),
        pl.BlockSpec(p["w2"].shape, const),
        pl.BlockSpec(p["b2"].shape, const),
        pl.BlockSpec(p["w5"].shape, const),
        pl.BlockSpec(p["b5"].shape, const),
        pl.BlockSpec(p["w3p"].shape, const),
        pl.BlockSpec(p["w6p"].shape, const),
        pl.BlockSpec(p["b36"].shape, const),
    ]
    out_specs = pl.BlockSpec((2, TB), lambda i: (0, i))

    param_bytes = sum(int(x.size) * x.dtype.itemsize for x in p.values())
    cost = pl.CostEstimate(
        flops=2 * Bp * (in_dim * 2 * HIDDEN + 2 * HIDDEN * HIDDEN + 2 * 2 * HIDDEN),
        transcendentals=0,
        bytes_accessed=param_bytes + Bp * (in_dim + 2) * 4,
    )

    qt = pl.pallas_call(
        _critic_kernel,
        out_shape=jax.ShapeDtypeStruct((2, Bp), jnp.float32),
        grid=grid,
        in_specs=in_specs,
        out_specs=out_specs,
        compiler_params=pltpu.CompilerParams(
            dimension_semantics=("parallel",)),   # batch tiles shard across TCs on v7x
        cost_estimate=cost,
    )(sa_t, p["w14"], p["b14"], p["w2"], p["b2"], p["w5"], p["b5"],
      p["w3p"], p["w6p"], p["b36"])

    # (2, Bp) -> two (B, 1) columns (pure slice, no extra copy of note).
    return qt[0, :B, None], qt[1, :B, None]


def init_params(key, state_dim, action_dim, weight_dtype=jnp.bfloat16):
    """torch.nn.Linear-style init (uniform +/- 1/sqrt(fan_in)), fused layout.

    Layout (all weights stored in torch's (out, in) orientation):
      w14 (512, in_dim) = [l1.W ; l4.W],     b14 (512, 1) = [l1.b ; l4.b]
      w2 / b2, w5 / b5  = l2 / l5
      w3p (2, 256) = [l3.W ; 0], w6p (2, 256) = [0 ; l6.W], b36 (2,1) = [l3.b ; l6.b]
    Weights are bf16 (MXU inputs), biases f32.
    """
    in_dim = state_dim + action_dim

    def linear(k, fan_in, fan_out):
        kw, kb = jax.random.split(k)
        bound = float(fan_in) ** -0.5
        w = jax.random.uniform(kw, (fan_out, fan_in), jnp.float32, -bound, bound)
        b = jax.random.uniform(kb, (fan_out, 1), jnp.float32, -bound, bound)
        return w, b

    ks = jax.random.split(key, 6)
    w1, b1 = linear(ks[0], in_dim, HIDDEN)   # l1
    w2, b2 = linear(ks[1], HIDDEN, HIDDEN)   # l2
    w3, b3 = linear(ks[2], HIDDEN, 1)        # l3
    w4, b4 = linear(ks[3], in_dim, HIDDEN)   # l4
    w5, b5 = linear(ks[4], HIDDEN, HIDDEN)   # l5
    w6, b6 = linear(ks[5], HIDDEN, 1)        # l6

    w3p = jnp.concatenate([w3, jnp.zeros_like(w3)], axis=0)   # (2, 256)
    w6p = jnp.concatenate([jnp.zeros_like(w6), w6], axis=0)   # (2, 256)
    b36 = jnp.concatenate([b3, b6], axis=0)                   # (2, 1)

    cast = lambda w: w.astype(weight_dtype)
    return {
        "w14": cast(jnp.concatenate([w1, w4], axis=0)),       # (512, in_dim)
        "b14": jnp.concatenate([b1, b4], axis=0),              # (512, 1) f32
        "w2": cast(w2), "b2": b2,
        "w5": cast(w5), "b5": b5,
        "w3p": cast(w3p), "w6p": cast(w6p), "b36": b36,
    }


def critic_forward_ref(state, action, params):
    """Pure-JAX reference (same bf16 math / same layout) for validation."""
    p = params
    cdt = p["w14"].dtype
    sa_t = jnp.concatenate([state, action], axis=1).T.astype(cdt)
    h = jnp.maximum(
        jnp.dot(p["w14"], sa_t, preferred_element_type=jnp.float32) + p["b14"], 0.0)
    h1 = h[:HIDDEN].astype(cdt)
    h2 = h[HIDDEN:].astype(cdt)
    g1 = jnp.maximum(
        jnp.dot(p["w2"], h1, preferred_element_type=jnp.float32) + p["b2"], 0.0)
    g2 = jnp.maximum(
        jnp.dot(p["w5"], h2, preferred_element_type=jnp.float32) + p["b5"], 0.0)
    qt = (jnp.dot(p["w3p"], g1.astype(cdt), preferred_element_type=jnp.float32)
          + jnp.dot(p["w6p"], g2.astype(cdt), preferred_element_type=jnp.float32)
          + p["b36"])
    return qt[0, :, None], qt[1, :, None]


if __name__ == "__main__":
    state_dim, action_dim = 12, 4
    key = jax.random.PRNGKey(0)
    k_state, k_action, k_params = jax.random.split(key, 3)
    params = init_params(k_params, state_dim, action_dim)

    # Small batch: single-tile path (TB = 8).
    batch = 8
    state = jax.random.normal(k_state, (batch, state_dim), jnp.float32)
    action = jax.random.normal(k_action, (batch, action_dim), jnp.float32)

    q1, q2 = critic_forward(state, action, params)
    jax.block_until_ready((q1, q2))
    q1_ref, q2_ref = critic_forward_ref(state, action, params)
    assert q1.shape == (batch, 1) and q2.shape == (batch, 1)
    assert jnp.allclose(q1, q1_ref, atol=5e-3, rtol=5e-3)
    assert jnp.allclose(q2, q2_ref, atol=5e-3, rtol=5e-3)

    # Larger ragged batch: padding + 2-tile grid (both TensorCores busy on v7x).
    batch2 = 1000
    state2 = jax.random.normal(k_state, (batch2, state_dim), jnp.float32)
    action2 = jax.random.normal(k_action, (batch2, action_dim), jnp.float32)
    q1b, q2b = critic_forward(state2, action2, params)
    jax.block_until_ready((q1b, q2b))
    q1b_ref, q2b_ref = critic_forward_ref(state2, action2, params)
    assert q1b.shape == (batch2, 1) and q2b.shape == (batch2, 1)
    assert jnp.allclose(q1b, q1b_ref, atol=5e-3, rtol=5e-3)
    assert jnp.allclose(q2b, q2b_ref, atol=5e-3, rtol=5e-3)

    print("KERNEL_OK")
</pallas_src>

<mosaic_0001>
module attributes {stable_mosaic.version = 11 : i64} {
  func.func @_critic_kernel(%arg0: i32, %arg1: memref<16x8xf32, #tpu.memory_space<vmem>>, %arg2: memref<512x16xbf16, #tpu.memory_space<vmem>>, %arg3: memref<512x1xf32, #tpu.memory_space<vmem>>, %arg4: memref<256x256xbf16, #tpu.memory_space<vmem>>, %arg5: memref<256x1xf32, #tpu.memory_space<vmem>>, %arg6: memref<256x256xbf16, #tpu.memory_space<vmem>>, %arg7: memref<256x1xf32, #tpu.memory_space<vmem>>, %arg8: memref<2x256xbf16, #tpu.memory_space<vmem>>, %arg9: memref<2x256xbf16, #tpu.memory_space<vmem>>, %arg10: memref<2x1xf32, #tpu.memory_space<vmem>>, %arg11: memref<2x8xf32, #tpu.memory_space<vmem>>) attributes {dimension_semantics = [#tpu.dimension_semantics<parallel>], iteration_bounds = array<i64: 1>, scalar_prefetch = 0 : i64, scratch_operands = 0 : i64, tpu.core_type = #tpu.core_type<tc>, window_params = [{transform_indices = @transform_0, window_bounds = array<i64: 16, 8>}, {pipeline_mode = #tpu.pipeline_mode<synchronous>, transform_indices = @transform_1, window_bounds = array<i64: 512, 16>}, {pipeline_mode = #tpu.pipeline_mode<synchronous>, transform_indices = @transform_2, window_bounds = array<i64: 512, 1>}, {pipeline_mode = #tpu.pipeline_mode<synchronous>, transform_indices = @transform_3, window_bounds = array<i64: 256, 256>}, {pipeline_mode = #tpu.pipeline_mode<synchronous>, transform_indices = @transform_4, window_bounds = array<i64: 256, 1>}, {pipeline_mode = #tpu.pipeline_mode<synchronous>, transform_indices = @transform_5, window_bounds = array<i64: 256, 256>}, {pipeline_mode = #tpu.pipeline_mode<synchronous>, transform_indices = @transform_6, window_bounds = array<i64: 256, 1>}, {pipeline_mode = #tpu.pipeline_mode<synchronous>, transform_indices = @transform_7, window_bounds = array<i64: 2, 256>}, {pipeline_mode = #tpu.pipeline_mode<synchronous>, transform_indices = @transform_8, window_bounds = array<i64: 2, 256>}, {pipeline_mode = #tpu.pipeline_mode<synchronous>, transform_indices = @transform_9, window_bounds = array<i64: 2, 1>}, {transform_indices = @transform_10, window_bounds = array<i64: 2, 8>}]} {
    %c0 = arith.constant 0 : index
    %c0_0 = arith.constant 0 : index
    %0 = vector.load %arg1[%c0, %c0_0] : memref<16x8xf32, #tpu.memory_space<vmem>>, vector<16x8xf32>
    %1 = arith.truncf %0 : vector<16x8xf32> to vector<16x8xbf16>
    %c0_1 = arith.constant 0 : index
    %c0_2 = arith.constant 0 : index
    %2 = vector.load %arg2[%c0_1, %c0_2] : memref<512x16xbf16, #tpu.memory_space<vmem>>, vector<512x16xbf16>
    %cst = arith.constant dense<0.000000e+00> : vector<512x8xf32>
    %3 = tpu.matmul %2, %1, %cst {dimension_numbers = #tpu.dot_dimension_numbers<[1], [0], [0], [1], [0, 0, 1, 1], [], []>} : vector<512x16xbf16>, vector<16x8xbf16>, vector<512x8xf32> -> vector<512x8xf32>
    %c0_3 = arith.constant 0 : index
    %c0_4 = arith.constant 0 : index
    %4 = vector.load %arg3[%c0_3, %c0_4] : memref<512x1xf32, #tpu.memory_space<vmem>>, vector<512x1xf32>
    %5 = vector.broadcast %4 : vector<512x1xf32> to vector<512x8xf32>
    %6 = arith.addf %3, %5 : vector<512x8xf32>
    %cst_5 = arith.constant 0.000000e+00 : f32
    %7 = vector.broadcast %cst_5 : f32 to vector<512x8xf32>
    %8 = arith.maximumf %6, %7 : vector<512x8xf32>
    %9 = vector.extract_strided_slice %8 {offsets = [0, 0], sizes = [256, 8], strides = [1, 1]} : vector<512x8xf32> to vector<256x8xf32>
    %10 = arith.truncf %9 : vector<256x8xf32> to vector<256x8xbf16>
    %11 = vector.extract_strided_slice %8 {offsets = [256, 0], sizes = [256, 8], strides = [1, 1]} : vector<512x8xf32> to vector<256x8xf32>
    %12 = arith.truncf %11 : vector<256x8xf32> to vector<256x8xbf16>
    %c0_6 = arith.constant 0 : index
    %c0_7 = arith.constant 0 : index
    %13 = vector.load %arg4[%c0_6, %c0_7] : memref<256x256xbf16, #tpu.memory_space<vmem>>, vector<256x256xbf16>
    %cst_8 = arith.constant dense<0.000000e+00> : vector<256x8xf32>
    %14 = tpu.matmul %13, %10, %cst_8 {dimension_numbers = #tpu.dot_dimension_numbers<[1], [0], [0], [1], [0, 0, 1, 1], [], []>} : vector<256x256xbf16>, vector<256x8xbf16>, vector<256x8xf32> -> vector<256x8xf32>
    %c0_9 = arith.constant 0 : index
    %c0_10 = arith.constant 0 : index
    %15 = vector.load %arg5[%c0_9, %c0_10] : memref<256x1xf32, #tpu.memory_space<vmem>>, vector<256x1xf32>
    %16 = vector.broadcast %15 : vector<256x1xf32> to vector<256x8xf32>
    %17 = arith.addf %14, %16 : vector<256x8xf32>
    %cst_11 = arith.constant 0.000000e+00 : f32
    %18 = vector.broadcast %cst_11 : f32 to vector<256x8xf32>
    %19 = arith.maximumf %17, %18 : vector<256x8xf32>
    %c0_12 = arith.constant 0 : index
    %c0_13 = arith.constant 0 : index
    %20 = vector.load %arg6[%c0_12, %c0_13] : memref<256x256xbf16, #tpu.memory_space<vmem>>, vector<256x256xbf16>
    %cst_14 = arith.constant dense<0.000000e+00> : vector<256x8xf32>
    %21 = tpu.matmul %20, %12, %cst_14 {dimension_numbers = #tpu.dot_dimension_numbers<[1], [0], [0], [1], [0, 0, 1, 1], [], []>} : vector<256x256xbf16>, vector<256x8xbf16>, vector<256x8xf32> -> vector<256x8xf32>
    %c0_15 = arith.constant 0 : index
    %c0_16 = arith.constant 0 : index
    %22 = vector.load %arg7[%c0_15, %c0_16] : memref<256x1xf32, #tpu.memory_space<vmem>>, vector<256x1xf32>
    %23 = vector.broadcast %22 : vector<256x1xf32> to vector<256x8xf32>
    %24 = arith.addf %21, %23 : vector<256x8xf32>
    %cst_17 = arith.constant 0.000000e+00 : f32
    %25 = vector.broadcast %cst_17 : f32 to vector<256x8xf32>
    %26 = arith.maximumf %24, %25 : vector<256x8xf32>
    %c0_18 = arith.constant 0 : index
    %c0_19 = arith.constant 0 : index
    %27 = vector.load %arg8[%c0_18, %c0_19] : memref<2x256xbf16, #tpu.memory_space<vmem>>, vector<2x256xbf16>
    %28 = arith.truncf %19 : vector<256x8xf32> to vector<256x8xbf16>
    %cst_20 = arith.constant dense<0.000000e+00> : vector<2x8xf32>
    %29 = tpu.matmul %27, %28, %cst_20 {dimension_numbers = #tpu.dot_dimension_numbers<[1], [0], [0], [1], [0, 0, 1, 1], [], []>} : vector<2x256xbf16>, vector<256x8xbf16>, vector<2x8xf32> -> vector<2x8xf32>
    %c0_21 = arith.constant 0 : index
    %c0_22 = arith.constant 0 : index
    %30 = vector.load %arg9[%c0_21, %c0_22] : memref<2x256xbf16, #tpu.memory_space<vmem>>, vector<2x256xbf16>
    %31 = arith.truncf %26 : vector<256x8xf32> to vector<256x8xbf16>
    %cst_23 = arith.constant dense<0.000000e+00> : vector<2x8xf32>
    %32 = tpu.matmul %30, %31, %cst_23 {dimension_numbers = #tpu.dot_dimension_numbers<[1], [0], [0], [1], [0, 0, 1, 1], [], []>} : vector<2x256xbf16>, vector<256x8xbf16>, vector<2x8xf32> -> vector<2x8xf32>
    %33 = arith.addf %29, %32 : vector<2x8xf32>
    %c0_24 = arith.constant 0 : index
    %c0_25 = arith.constant 0 : index
    %34 = vector.load %arg10[%c0_24, %c0_25] : memref<2x1xf32, #tpu.memory_space<vmem>>, vector<2x1xf32>
    %35 = vector.broadcast %34 : vector<2x1xf32> to vector<2x8xf32>
    %36 = arith.addf %33, %35 : vector<2x8xf32>
    %c0_26 = arith.constant 0 : index
    %c0_27 = arith.constant 0 : index
    %37 = vector.load %arg11[%c0_26, %c0_27] : memref<2x8xf32, #tpu.memory_space<vmem>>, vector<2x8xf32>
    tpu.vector_store %arg11[%c0_26, %c0_27], %36 {strides = array<i32>} : memref<2x8xf32, #tpu.memory_space<vmem>>, vector<2x8xf32>,
    return
  }
  func.func @transform_0(%arg0: i32) -> (i32, i32) {
    %c0_i32 = arith.constant 0 : i32
    %c0_i32_0 = arith.constant 0 : i32
    return %c0_i32, %arg0 : i32, i32
  }
  func.func @transform_1(%arg0: i32) -> (i32, i32) {
    %c0_i32 = arith.constant 0 : i32
    %c0_i32_0 = arith.constant 0 : i32
    %c0_i32_1 = arith.constant 0 : i32
    return %c0_i32, %c0_i32_0 : i32, i32
  }
  func.func @transform_2(%arg0: i32) -> (i32, i32) {
    %c0_i32 = arith.constant 0 : i32
    %c0_i32_0 = arith.constant 0 : i32
    %c0_i32_1 = arith.constant 0 : i32
    return %c0_i32, %c0_i32_0 : i32, i32
  }
  func.func @transform_3(%arg0: i32) -> (i32, i32) {
    %c0_i32 = arith.constant 0 : i32
    %c0_i32_0 = arith.constant 0 : i32
    %c0_i32_1 = arith.constant 0 : i32
    return %c0_i32, %c0_i32_0 : i32, i32
  }
  func.func @transform_4(%arg0: i32) -> (i32, i32) {
    %c0_i32 = arith.constant 0 : i32
    %c0_i32_0 = arith.constant 0 : i32
    %c0_i32_1 = arith.constant 0 : i32
    return %c0_i32, %c0_i32_0 : i32, i32
  }
  func.func @transform_5(%arg0: i32) -> (i32, i32) {
    %c0_i32 = arith.constant 0 : i32
    %c0_i32_0 = arith.constant 0 : i32
    %c0_i32_1 = arith.constant 0 : i32
    return %c0_i32, %c0_i32_0 : i32, i32
  }
  func.func @transform_6(%arg0: i32) -> (i32, i32) {
    %c0_i32 = arith.constant 0 : i32
    %c0_i32_0 = arith.constant 0 : i32
    %c0_i32_1 = arith.constant 0 : i32
    return %c0_i32, %c0_i32_0 : i32, i32
  }
  func.func @transform_7(%arg0: i32) -> (i32, i32) {
    %c0_i32 = arith.constant 0 : i32
    %c0_i32_0 = arith.constant 0 : i32
    %c0_i32_1 = arith.constant 0 : i32
    return %c0_i32, %c0_i32_0 : i32, i32
  }
  func.func @transform_8(%arg0: i32) -> (i32, i32) {
    %c0_i32 = arith.constant 0 : i32
    %c0_i32_0 = arith.constant 0 : i32
    %c0_i32_1 = arith.constant 0 : i32
    return %c0_i32, %c0_i32_0 : i32, i32
  }
  func.func @transform_9(%arg0: i32) -> (i32, i32) {
    %c0_i32 = arith.constant 0 : i32
    %c0_i32_0 = arith.constant 0 : i32
    %c0_i32_1 = arith.constant 0 : i32
    return %c0_i32, %c0_i32_0 : i32, i32
  }
  func.func @transform_10(%arg0: i32) -> (i32, i32) {
    %c0_i32 = arith.constant 0 : i32
    %c0_i32_0 = arith.constant 0 : i32
    return %c0_i32, %arg0 : i32, i32
  }
}

</mosaic_0001>

<llo_original>
// kernel: tpu_custom_call.1
$region0: #{tpu_custom_call.1}
  #allocation0 [shape = 'u32[]', space=smem, size = 0x4, offset = 0x4, fixed_abs, tag = 'smem constant byte address 0x4 - core index']
  #allocation1 [shape = 'u32[144,128]{1,0:T(1,128)}', space=vmem, size = 0x12000, scoped, tag = 'internal scratch']
  %s0 = inlined_call_operand.vmem [shape: f32[16,8], index: 0, kind: input, shape index: {}]
  %s1 = inlined_call_operand.vmem [shape: bf16[512,16], index: 1, kind: input, shape index: {}]
  %s2 = inlined_call_operand.vmem [shape: f32[512,1], index: 2, kind: input, shape index: {}]
  %s3 = inlined_call_operand.vmem [shape: bf16[256,256], index: 3, kind: input, shape index: {}]
  %s4 = inlined_call_operand.vmem [shape: f32[256,1], index: 4, kind: input, shape index: {}]
  %s5 = inlined_call_operand.vmem [shape: bf16[256,256], index: 5, kind: input, shape index: {}]
  %s6 = inlined_call_operand.vmem [shape: f32[256,1], index: 6, kind: input, shape index: {}]
  %s7 = inlined_call_operand.vmem [shape: bf16[2,256], index: 7, kind: input, shape index: {}]
  %s8 = inlined_call_operand.vmem [shape: bf16[2,256], index: 8, kind: input, shape index: {}]
  %s9 = inlined_call_operand.vmem [shape: f32[2,1], index: 9, kind: input, shape index: {}]
  %s10 = inlined_call_operand.hbm [shape: f32[2,8], index: 10, kind: output, shape index: {}]
  %s11 = sld [smem:[#allocation0]]
  $region50: #{tpu_custom_call.1} parent=0
    _
  %s13 = ssub.s32 1, %s11
  %s14 = scalar_select 0, %s13, %s11
  $region1: #{tpu_custom_call.1} parent=0
    #allocation2 [shape = 'u8[1024]{0}', space=vmem, size = 0x400, scoped, tag = 'output window, operand 0, single buffered']
    #allocation3 [shape = 's32[1]{0}', space=sflag, size = 0x4, scoped, tag = 'scoped memory for tpu_custom_call.1']
    %15 = vsyncpa [#allocation3], 0
    // Predicated region
    $region2: #{tpu_custom_call.1} parent=1 // pred_check
      _
    $region3: #{tpu_custom_call.1} parent=1 // pred_check_branch
      %17 = sbr.rel (0) target = $region5
    $region4: #{tpu_custom_call.1} parent=1 // pred_region
      _
    $region5: #{tpu_custom_call.1} parent=1 // pred_fallthru
      _
    // Predicated region
    $region6: #{tpu_custom_call.1} parent=1 // pred_check
      _
    $region7: #{tpu_custom_call.1} parent=1 // pred_check_branch
      %19 = sbr.rel (0) target = $region9
    $region8: #{tpu_custom_call.1} parent=1 // pred_region
      _
    $region9: #{tpu_custom_call.1} parent=1 // pred_fallthru
      _
    // Predicated region
    $region10: #{tpu_custom_call.1} parent=1 // pred_check
      _
    $region11: #{tpu_custom_call.1} parent=1 // pred_check_branch
      %21 = sbr.rel (0) target = $region13
    $region12: #{tpu_custom_call.1} parent=1 // pred_region
      _
    $region13: #{tpu_custom_call.1} parent=1 // pred_fallthru
      _
    // Predicated region
    $region14: #{tpu_custom_call.1} parent=1 // pred_check
      _
    $region15: #{tpu_custom_call.1} parent=1 // pred_check_branch
      %23 = sbr.rel (0) target = $region17
    $region16: #{tpu_custom_call.1} parent=1 // pred_region
      _
    $region17: #{tpu_custom_call.1} parent=1 // pred_fallthru
      _
    // Predicated region
    $region18: #{tpu_custom_call.1} parent=1 // pred_check
      _
    $region19: #{tpu_custom_call.1} parent=1 // pred_check_branch
      %25 = sbr.rel (0) target = $region21
    $region20: #{tpu_custom_call.1} parent=1 // pred_region
      _
    $region21: #{tpu_custom_call.1} parent=1 // pred_fallthru
      _
    // Predicated region
    $region22: #{tpu_custom_call.1} parent=1 // pred_check
      _
    $region23: #{tpu_custom_call.1} parent=1 // pred_check_branch
      %27 = sbr.rel (0) target = $region25
    $region24: #{tpu_custom_call.1} parent=1 // pred_region
      _
    $region25: #{tpu_custom_call.1} parent=1 // pred_fallthru
      _
    // Predicated region
    $region26: #{tpu_custom_call.1} parent=1 // pred_check
      _
    $region27: #{tpu_custom_call.1} parent=1 // pred_check_branch
      %29 = sbr.rel (0) target = $region29
    $region28: #{tpu_custom_call.1} parent=1 // pred_region
      _
    $region29: #{tpu_custom_call.1} parent=1 // pred_fallthru
      _
    // Predicated region
    $region30: #{tpu_custom_call.1} parent=1 // pred_check
      _
    $region31: #{tpu_custom_call.1} parent=1 // pred_check_branch
      %31 = sbr.rel (0) target = $region33
    $region32: #{tpu_custom_call.1} parent=1 // pred_region
      _
    $region33: #{tpu_custom_call.1} parent=1 // pred_fallthru
      _
    // Predicated region
    $region34: #{tpu_custom_call.1} parent=1 // pred_check
      _
    $region35: #{tpu_custom_call.1} parent=1 // pred_check_branch
      %33 = sbr.rel (0) target = $region37
    $region36: #{tpu_custom_call.1} parent=1 // pred_region
      _
    $region37: #{tpu_custom_call.1} parent=1 // pred_fallthru
      _
    // Predicated region
    $region38: #{tpu_custom_call.1} parent=1 // pred_check
      _
    $region39: #{tpu_custom_call.1} parent=1 // pred_check_branch
      %35 = sbr.rel (0) target = $region41
    $region40: #{tpu_custom_call.1} parent=1 // pred_region
      _
    $region41: #{tpu_custom_call.1} parent=1 // pred_fallthru
      _
    %v37 = vld [vmem:[%s0] sm:$0xff]
    %v38 = vld [vmem:[%s0 + $0x8] sm:$0xff]
    %v39 = vpack.c.bf16 %v38, %v37
    %v40 = vld [vmem:[%s1] sm:$0xf]
    %v41 = vld [vmem:[%s1 + $0x4] sm:$0xf]
    %v42 = vld [vmem:[%s1 + $0x8] sm:$0xf]
    %v43 = vld [vmem:[%s1 + $0xc] sm:$0xf]
    %v44 = vld [vmem:[%s1 + $0x10] sm:$0xf]
    %v45 = vld [vmem:[%s1 + $0x14] sm:$0xf]
    %v46 = vld [vmem:[%s1 + $0x18] sm:$0xf]
    %v47 = vld [vmem:[%s1 + $0x1c] sm:$0xf]
    %v48 = vld [vmem:[%s1 + $0x20] sm:$0xf]
    %v49 = vld [vmem:[%s1 + $0x24] sm:$0xf]
    %v50 = vld [vmem:[%s1 + $0x28] sm:$0xf]
    %v51 = vld [vmem:[%s1 + $0x2c] sm:$0xf]
    %v52 = vld [vmem:[%s1 + $0x30] sm:$0xf]
    %v53 = vld [vmem:[%s1 + $0x34] sm:$0xf]
    %v54 = vld [vmem:[%s1 + $0x38] sm:$0xf]
    %v55 = vld [vmem:[%s1 + $0x3c] sm:$0xf]
    %v56 = vld [vmem:[%s1 + $0x40] sm:$0xf]
    %v57 = vld [vmem:[%s1 + $0x44] sm:$0xf]
    %v58 = vld [vmem:[%s1 + $0x48] sm:$0xf]
    %v59 = vld [vmem:[%s1 + $0x4c] sm:$0xf]
    %v60 = vld [vmem:[%s1 + $0x50] sm:$0xf]
    %v61 = vld [vmem:[%s1 + $0x54] sm:$0xf]
    %v62 = vld [vmem:[%s1 + $0x58] sm:$0xf]
    %v63 = vld [vmem:[%s1 + $0x5c] sm:$0xf]
    %v64 = vld [vmem:[%s1 + $0x60] sm:$0xf]
    %v65 = vld [vmem:[%s1 + $0x64] sm:$0xf]
    %v66 = vld [vmem:[%s1 + $0x68] sm:$0xf]
    %v67 = vld [vmem:[%s1 + $0x6c] sm:$0xf]
    %v68 = vld [vmem:[%s1 + $0x70] sm:$0xf]
    %v69 = vld [vmem:[%s1 + $0x74] sm:$0xf]
    %v70 = vld [vmem:[%s1 + $0x78] sm:$0xf]
    %v71 = vld [vmem:[%s1 + $0x7c] sm:$0xf]
    %v72 = vld [vmem:[%s1 + $0x80] sm:$0xf]
    %v73 = vld [vmem:[%s1 + $0x84] sm:$0xf]
    %v74 = vld [vmem:[%s1 + $0x88] sm:$0xf]
    %v75 = vld [vmem:[%s1 + $0x8c] sm:$0xf]
    %v76 = vld [vmem:[%s1 + $0x90] sm:$0xf]
    %v77 = vld [vmem:[%s1 + $0x94] sm:$0xf]
    %v78 = vld [vmem:[%s1 + $0x98] sm:$0xf]
    %v79 = vld [vmem:[%s1 + $0x9c] sm:$0xf]
    %v80 = vld [vmem:[%s1 + $0xa0] sm:$0xf]
    %v81 = vld [vmem:[%s1 + $0xa4] sm:$0xf]
    %v82 = vld [vmem:[%s1 + $0xa8] sm:$0xf]
    %v83 = vld [vmem:[%s1 + $0xac] sm:$0xf]
    %v84 = vld [vmem:[%s1 + $0xb0] sm:$0xf]
    %v85 = vld [vmem:[%s1 + $0xb4] sm:$0xf]
    %v86 = vld [vmem:[%s1 + $0xb8] sm:$0xf]
    %v87 = vld [vmem:[%s1 + $0xbc] sm:$0xf]
    %v88 = vld [vmem:[%s1 + $0xc0] sm:$0xf]
    %v89 = vld [vmem:[%s1 + $0xc4] sm:$0xf]
    %v90 = vld [vmem:[%s1 + $0xc8] sm:$0xf]
    %v91 = vld [vmem:[%s1 + $0xcc] sm:$0xf]
    %v92 = vld [vmem:[%s1 + $0xd0] sm:$0xf]
    %v93 = vld [vmem:[%s1 + $0xd4] sm:$0xf]
    %v94 = vld [vmem:[%s1 + $0xd8] sm:$0xf]
    %v95 = vld [vmem:[%s1 + $0xdc] sm:$0xf]
    %v96 = vld [vmem:[%s1 + $0xe0] sm:$0xf]
    %v97 = vld [vmem:[%s1 + $0xe4] sm:$0xf]
    %v98 = vld [vmem:[%s1 + $0xe8] sm:$0xf]
    %v99 = vld [vmem:[%s1 + $0xec] sm:$0xf]
    %v100 = vld [vmem:[%s1 + $0xf0] sm:$0xf]
    %v101 = vld [vmem:[%s1 + $0xf4] sm:$0xf]
    %v102 = vld [vmem:[%s1 + $0xf8] sm:$0xf]
    %v103 = vld [vmem:[%s1 + $0xfc] sm:$0xf]
    %v104 = vld [vmem:[%s2] sm:$0xff]
    %v105 = vld [vmem:[%s2 + $0x8] sm:$0xff]
    %v106 = vld [vmem:[%s2 + $0x10] sm:$0xff]
    %v107 = vld [vmem:[%s2 + $0x18] sm:$0xff]
    %v108 = vld [vmem:[%s2 + $0x20] sm:$0xff]
    %v109 = vld [vmem:[%s2 + $0x28] sm:$0xff]
    %v110 = vld [vmem:[%s2 + $0x30] sm:$0xff]
    %v111 = vld [vmem:[%s2 + $0x38] sm:$0xff]
    %v112 = vld [vmem:[%s2 + $0x40] sm:$0xff]
    %v113 = vld [vmem:[%s2 + $0x48] sm:$0xff]
    %v114 = vld [vmem:[%s2 + $0x50] sm:$0xff]
    %v115 = vld [vmem:[%s2 + $0x58] sm:$0xff]
    %v116 = vld [vmem:[%s2 + $0x60] sm:$0xff]
    %v117 = vld [vmem:[%s2 + $0x68] sm:$0xff]
    %v118 = vld [vmem:[%s2 + $0x70] sm:$0xff]
    %v119 = vld [vmem:[%s2 + $0x78] sm:$0xff]
    %v120 = vld [vmem:[%s2 + $0x80] sm:$0xff]
    %v121 = vld [vmem:[%s2 + $0x88] sm:$0xff]
    %v122 = vld [vmem:[%s2 + $0x90] sm:$0xff]
    %v123 = vld [vmem:[%s2 + $0x98] sm:$0xff]
    %v124 = vld [vmem:[%s2 + $0xa0] sm:$0xff]
    %v125 = vld [vmem:[%s2 + $0xa8] sm:$0xff]
    %v126 = vld [vmem:[%s2 + $0xb0] sm:$0xff]
    %v127 = vld [vmem:[%s2 + $0xb8] sm:$0xff]
    %v128 = vld [vmem:[%s2 + $0xc0] sm:$0xff]
    %v129 = vld [vmem:[%s2 + $0xc8] sm:$0xff]
    %v130 = vld [vmem:[%s2 + $0xd0] sm:$0xff]
    %v131 = vld [vmem:[%s2 + $0xd8] sm:$0xff]
    %v132 = vld [vmem:[%s2 + $0xe0] sm:$0xff]
    %v133 = vld [vmem:[%s2 + $0xe8] sm:$0xff]
    %v134 = vld [vmem:[%s2 + $0xf0] sm:$0xff]
    %v135 = vld [vmem:[%s2 + $0xf8] sm:$0xff]
    %v136 = vld [vmem:[%s2 + $0x100] sm:$0xff]
    %v137 = vld [vmem:[%s2 + $0x108] sm:$0xff]
    %v138 = vld [vmem:[%s2 + $0x110] sm:$0xff]
    %v139 = vld [vmem:[%s2 + $0x118] sm:$0xff]
    %v140 = vld [vmem:[%s2 + $0x120] sm:$0xff]
    %v141 = vld [vmem:[%s2 + $0x128] sm:$0xff]
    %v142 = vld [vmem:[%s2 + $0x130] sm:$0xff]
    %v143 = vld [vmem:[%s2 + $0x138] sm:$0xff]
    %v144 = vld [vmem:[%s2 + $0x140] sm:$0xff]
    %v145 = vld [vmem:[%s2 + $0x148] sm:$0xff]
    %v146 = vld [vmem:[%s2 + $0x150] sm:$0xff]
    %v147 = vld [vmem:[%s2 + $0x158] sm:$0xff]
    %v148 = vld [vmem:[%s2 + $0x160] sm:$0xff]
    %v149 = vld [vmem:[%s2 + $0x168] sm:$0xff]
    %v150 = vld [vmem:[%s2 + $0x170] sm:$0xff]
    %v151 = vld [vmem:[%s2 + $0x178] sm:$0xff]
    %v152 = vld [vmem:[%s2 + $0x180] sm:$0xff]
    %v153 = vld [vmem:[%s2 + $0x188] sm:$0xff]
    %v154 = vld [vmem:[%s2 + $0x190] sm:$0xff]
    %v155 = vld [vmem:[%s2 + $0x198] sm:$0xff]
    %v156 = vld [vmem:[%s2 + $0x1a0] sm:$0xff]
    %v157 = vld [vmem:[%s2 + $0x1a8] sm:$0xff]
    %v158 = vld [vmem:[%s2 + $0x1b0] sm:$0xff]
    %v159 = vld [vmem:[%s2 + $0x1b8] sm:$0xff]
    %v160 = vld [vmem:[%s2 + $0x1c0] sm:$0xff]
    %v161 = vld [vmem:[%s2 + $0x1c8] sm:$0xff]
    %v162 = vld [vmem:[%s2 + $0x1d0] sm:$0xff]
    %v163 = vld [vmem:[%s2 + $0x1d8] sm:$0xff]
    %v164 = vld [vmem:[%s2 + $0x1e0] sm:$0xff]
    %v165 = vld [vmem:[%s2 + $0x1e8] sm:$0xff]
    %v166 = vld [vmem:[%s2 + $0x1f0] sm:$0xff]
    %v167 = vld [vmem:[%s2 + $0x1f8] sm:$0xff]
    %169 = vset.pattern.permute.xlu0 0
    %170 = vperm.xlu0 %169, %v104
    %v171 = vpop.permute.xlu0 %170
    %174 = vset.pattern.permute.xlu0 0
    %175 = vperm.xlu0 %174, %v105
    %v176 = vpop.permute.xlu0 %175
    %179 = vset.pattern.permute.xlu0 0
    %180 = vperm.xlu0 %179, %v106
    %v181 = vpop.permute.xlu0 %180
    %184 = vset.pattern.permute.xlu0 0
    %185 = vperm.xlu0 %184, %v107
    %v186 = vpop.permute.xlu0 %185
    %189 = vset.pattern.permute.xlu0 0
    %190 = vperm.xlu0 %189, %v108
    %v191 = vpop.permute.xlu0 %190
    %194 = vset.pattern.permute.xlu0 0
    %195 = vperm.xlu0 %194, %v109
    %v196 = vpop.permute.xlu0 %195
    %199 = vset.pattern.permute.xlu0 0
    %200 = vperm.xlu0 %199, %v110
    %v201 = vpop.permute.xlu0 %200
    %204 = vset.pattern.permute.xlu0 0
    %205 = vperm.xlu0 %204, %v111
    %v206 = vpop.permute.xlu0 %205
    %209 = vset.pattern.permute.xlu0 0
    %210 = vperm.xlu0 %209, %v112
    %v211 = vpop.permute.xlu0 %210
    %214 = vset.pattern.permute.xlu0 0
    %215 = vperm.xlu0 %214, %v113
    %v216 = vpop.permute.xlu0 %215
    %219 = vset.pattern.permute.xlu0 0
    %220 = vperm.xlu0 %219, %v114
    %v221 = vpop.permute.xlu0 %220
    %224 = vset.pattern.permute.xlu0 0
    %225 = vperm.xlu0 %224, %v115
    %v226 = vpop.permute.xlu0 %225
    %229 = vset.pattern.permute.xlu0 0
    %230 = vperm.xlu0 %229, %v116
    %v231 = vpop.permute.xlu0 %230
    %234 = vset.pattern.permute.xlu0 0
    %235 = vperm.xlu0 %234, %v117
    %v236 = vpop.permute.xlu0 %235
    %239 = vset.pattern.permute.xlu0 0
    %240 = vperm.xlu0 %239, %v118
    %v241 = vpop.permute.xlu0 %240
    %244 = vset.pattern.permute.xlu0 0
    %245 = vperm.xlu0 %244, %v119
    %v246 = vpop.permute.xlu0 %245
    %249 = vset.pattern.permute.xlu0 0
    %250 = vperm.xlu0 %249, %v120
    %v251 = vpop.permute.xlu0 %250
    %254 = vset.pattern.permute.xlu0 0
    %255 = vperm.xlu0 %254, %v121
    %v256 = vpop.permute.xlu0 %255
    %259 = vset.pattern.permute.xlu0 0
    %260 = vperm.xlu0 %259, %v122
    %v261 = vpop.permute.xlu0 %260
    %264 = vset.pattern.permute.xlu0 0
    %265 = vperm.xlu0 %264, %v123
    %v266 = vpop.permute.xlu0 %265
    %269 = vset.pattern.permute.xlu0 0
    %270 = vperm.xlu0 %269, %v124
    %v271 = vpop.permute.xlu0 %270
    %274 = vset.pattern.permute.xlu0 0
    %275 = vperm.xlu0 %274, %v125
    %v276 = vpop.permute.xlu0 %275
    %279 = vset.pattern.permute.xlu0 0
    %280 = vperm.xlu0 %279, %v126
    %v281 = vpop.permute.xlu0 %280
    %284 = vset.pattern.permute.xlu0 0
    %285 = vperm.xlu0 %284, %v127
    %v286 = vpop.permute.xlu0 %285
    %289 = vset.pattern.permute.xlu0 0
    %290 = vperm.xlu0 %289, %v128
    %v291 = vpop.permute.xlu0 %290
    %294 = vset.pattern.permute.xlu0 0
    %295 = vperm.xlu0 %294, %v129
    %v296 = vpop.permute.xlu0 %295
    %299 = vset.pattern.permute.xlu0 0
    %300 = vperm.xlu0 %299, %v130
    %v301 = vpop.permute.xlu0 %300
    %304 = vset.pattern.permute.xlu0 0
    %305 = vperm.xlu0 %304, %v131
    %v306 = vpop.permute.xlu0 %305
    %309 = vset.pattern.permute.xlu0 0
    %310 = vperm.xlu0 %309, %v132
    %v311 = vpop.permute.xlu0 %310
    %314 = vset.pattern.permute.xlu0 0
    %315 = vperm.xlu0 %314, %v133
    %v316 = vpop.permute.xlu0 %315
    %319 = vset.pattern.permute.xlu0 0
    %320 = vperm.xlu0 %319, %v134
    %v321 = vpop.permute.xlu0 %320
    %324 = vset.pattern.permute.xlu0 0
    %325 = vperm.xlu0 %324, %v135
    %v326 = vpop.permute.xlu0 %325
    %329 = vset.pattern.permute.xlu0 0
    %330 = vperm.xlu0 %329, %v136
    %v331 = vpop.permute.xlu0 %330
    %334 = vset.pattern.permute.xlu0 0
    %335 = vperm.xlu0 %334, %v137
    %v336 = vpop.permute.xlu0 %335
    %339 = vset.pattern.permute.xlu0 0
    %340 = vperm.xlu0 %339, %v138
    %v341 = vpop.permute.xlu0 %340
    %344 = vset.pattern.permute.xlu0 0
    %345 = vperm.xlu0 %344, %v139
    %v346 = vpop.permute.xlu0 %345
    %349 = vset.pattern.permute.xlu0 0
    %350 = vperm.xlu0 %349, %v140
    %v351 = vpop.permute.xlu0 %350
    %354 = vset.pattern.permute.xlu0 0
    %355 = vperm.xlu0 %354, %v141
    %v356 = vpop.permute.xlu0 %355
    %359 = vset.pattern.permute.xlu0 0
    %360 = vperm.xlu0 %359, %v142
    %v361 = vpop.permute.xlu0 %360
    %364 = vset.pattern.permute.xlu0 0
    %365 = vperm.xlu0 %364, %v143
    %v366 = vpop.permute.xlu0 %365
    %369 = vset.pattern.permute.xlu0 0
    %370 = vperm.xlu0 %369, %v144
    %v371 = vpop.permute.xlu0 %370
    %374 = vset.pattern.permute.xlu0 0
    %375 = vperm.xlu0 %374, %v145
    %v376 = vpop.permute.xlu0 %375
    %379 = vset.pattern.permute.xlu0 0
    %380 = vperm.xlu0 %379, %v146
    %v381 = vpop.permute.xlu0 %380
    %384 = vset.pattern.permute.xlu0 0
    %385 = vperm.xlu0 %384, %v147
    %v386 = vpop.permute.xlu0 %385
    %389 = vset.pattern.permute.xlu0 0
    %390 = vperm.xlu0 %389, %v148
    %v391 = vpop.permute.xlu0 %390
    %394 = vset.pattern.permute.xlu0 0
    %395 = vperm.xlu0 %394, %v149
    %v396 = vpop.permute.xlu0 %395
    %399 = vset.pattern.permute.xlu0 0
    %400 = vperm.xlu0 %399, %v150
    %v401 = vpop.permute.xlu0 %400
    %404 = vset.pattern.permute.xlu0 0
    %405 = vperm.xlu0 %404, %v151
    %v406 = vpop.permute.xlu0 %405
    %409 = vset.pattern.permute.xlu0 0
    %410 = vperm.xlu0 %409, %v152
    %v411 = vpop.permute.xlu0 %410
    %414 = vset.pattern.permute.xlu0 0
    %415 = vperm.xlu0 %414, %v153
    %v416 = vpop.permute.xlu0 %415
    %419 = vset.pattern.permute.xlu0 0
    %420 = vperm.xlu0 %419, %v154
    %v421 = vpop.permute.xlu0 %420
    %424 = vset.pattern.permute.xlu0 0
    %425 = vperm.xlu0 %424, %v155
    %v426 = vpop.permute.xlu0 %425
    %429 = vset.pattern.permute.xlu0 0
    %430 = vperm.xlu0 %429, %v156
    %v431 = vpop.permute.xlu0 %430
    %434 = vset.pattern.permute.xlu0 0
    %435 = vperm.xlu0 %434, %v157
    %v436 = vpop.permute.xlu0 %435
    %439 = vset.pattern.permute.xlu0 0
    %440 = vperm.xlu0 %439, %v158
    %v441 = vpop.permute.xlu0 %440
    %444 = vset.pattern.permute.xlu0 0
    %445 = vperm.xlu0 %444, %v159
    %v446 = vpop.permute.xlu0 %445
    %449 = vset.pattern.permute.xlu0 0
    %450 = vperm.xlu0 %449, %v160
    %v451 = vpop.permute.xlu0 %450
    %454 = vset.pattern.permute.xlu0 0
    %455 = vperm.xlu0 %454, %v161
    %v456 = vpop.permute.xlu0 %455
    %459 = vset.pattern.permute.xlu0 0
    %460 = vperm.xlu0 %459, %v162
    %v461 = vpop.permute.xlu0 %460
    %464 = vset.pattern.permute.xlu0 0
    %465 = vperm.xlu0 %464, %v163
    %v466 = vpop.permute.xlu0 %465
    %469 = vset.pattern.permute.xlu0 0
    %470 = vperm.xlu0 %469, %v164
    %v471 = vpop.permute.xlu0 %470
    %474 = vset.pattern.permute.xlu0 0
    %475 = vperm.xlu0 %474, %v165
    %v476 = vpop.permute.xlu0 %475
    %479 = vset.pattern.permute.xlu0 0
    %480 = vperm.xlu0 %479, %v166
    %v481 = vpop.permute.xlu0 %480
    %484 = vset.pattern.permute.xlu0 0
    %485 = vperm.xlu0 %484, %v167
    %v486 = vpop.permute.xlu0 %485
    %v552 = vunpack.c.l.b16 %v40
    %v553 = vunpack.c.l.b16 %v41
    %v554 = vunpack.c.l.b16 %v42
    %v555 = vunpack.c.l.b16 %v43
    %v556 = vunpack.c.l.b16 %v44
    %v557 = vunpack.c.l.b16 %v45
    %v558 = vunpack.c.l.b16 %v46
    %v559 = vunpack.c.l.b16 %v47
    %v560 = vunpack.c.l.b16 %v48
    %v561 = vunpack.c.l.b16 %v49
    %v562 = vunpack.c.l.b16 %v50
    %v563 = vunpack.c.l.b16 %v51
    %v564 = vunpack.c.l.b16 %v52
    %v565 = vunpack.c.l.b16 %v53
    %v566 = vunpack.c.l.b16 %v54
    %v567 = vunpack.c.l.b16 %v55
    %v568 = vunpack.c.l.b16 %v56
    %v569 = vunpack.c.l.b16 %v57
    %v570 = vunpack.c.l.b16 %v58
    %v571 = vunpack.c.l.b16 %v59
    %v572 = vunpack.c.l.b16 %v60
    %v573 = vunpack.c.l.b16 %v61
    %v574 = vunpack.c.l.b16 %v62
    %v575 = vunpack.c.l.b16 %v63
    %v576 = vunpack.c.l.b16 %v64
    %v577 = vunpack.c.l.b16 %v65
    %v578 = vunpack.c.l.b16 %v66
    %v579 = vunpack.c.l.b16 %v67
    %v580 = vunpack.c.l.b16 %v68
    %v581 = vunpack.c.l.b16 %v69
    %v582 = vunpack.c.l.b16 %v70
    %v583 = vunpack.c.l.b16 %v71
    %v584 = vunpack.c.l.b16 %v72
    %v585 = vunpack.c.l.b16 %v73
    %v586 = vunpack.c.l.b16 %v74
    %v587 = vunpack.c.l.b16 %v75
    %v588 = vunpack.c.l.b16 %v76
    %v589 = vunpack.c.l.b16 %v77
    %v590 = vunpack.c.l.b16 %v78
    %v591 = vunpack.c.l.b16 %v79
    %v592 = vunpack.c.l.b16 %v80
    %v593 = vunpack.c.l.b16 %v81
    %v594 = vunpack.c.l.b16 %v82
    %v595 = vunpack.c.l.b16 %v83
    %v596 = vunpack.c.l.b16 %v84
    %v597 = vunpack.c.l.b16 %v85
    %v598 = vunpack.c.l.b16 %v86
    %v599 = vunpack.c.l.b16 %v87
    %v600 = vunpack.c.l.b16 %v88
    %v601 = vunpack.c.l.b16 %v89
    %v602 = vunpack.c.l.b16 %v90
    %v603 = vunpack.c.l.b16 %v91
    %v604 = vunpack.c.l.b16 %v92
    %v605 = vunpack.c.l.b16 %v93
    %v606 = vunpack.c.l.b16 %v94
    %v607 = vunpack.c.l.b16 %v95
    %v608 = vunpack.c.l.b16 %v96
    %v609 = vunpack.c.l.b16 %v97
    %v610 = vunpack.c.l.b16 %v98
    %v611 = vunpack.c.l.b16 %v99
    %v612 = vunpack.c.l.b16 %v100
    %v613 = vunpack.c.l.b16 %v101
    %v614 = vunpack.c.l.b16 %v102
    %v615 = vunpack.c.l.b16 %v103
    %v616 = vpack.c.b16 %v553, %v552
    %v617 = vpack.c.b16 %v555, %v554
    %v618 = vpack.c.b16 %v557, %v556
    %v619 = vpack.c.b16 %v559, %v558
    %v620 = vpack.c.b16 %v561, %v560
    %v621 = vpack.c.b16 %v563, %v562
    %v622 = vpack.c.b16 %v565, %v564
    %v623 = vpack.c.b16 %v567, %v566
    %v624 = vpack.c.b16 %v569, %v568
    %v625 = vpack.c.b16 %v571, %v570
    %v626 = vpack.c.b16 %v573, %v572
    %v627 = vpack.c.b16 %v575, %v574
    %v628 = vpack.c.b16 %v577, %v576
    %v629 = vpack.c.b16 %v579, %v578
    %v630 = vpack.c.b16 %v581, %v580
    %v631 = vpack.c.b16 %v583, %v582
    %v632 = vpack.c.b16 %v585, %v584
    %v633 = vpack.c.b16 %v587, %v586
    %v634 = vpack.c.b16 %v589, %v588
    %v635 = vpack.c.b16 %v591, %v590
    %v636 = vpack.c.b16 %v593, %v592
    %v637 = vpack.c.b16 %v595, %v594
    %v638 = vpack.c.b16 %v597, %v596
    %v639 = vpack.c.b16 %v599, %v598
    %v640 = vpack.c.b16 %v601, %v600
    %v641 = vpack.c.b16 %v603, %v602
    %v642 = vpack.c.b16 %v605, %v604
    %v643 = vpack.c.b16 %v607, %v606
    %v644 = vpack.c.b16 %v609, %v608
    %v645 = vpack.c.b16 %v611, %v610
    %v646 = vpack.c.b16 %v613, %v612
    %v647 = vpack.c.b16 %v615, %v614
    %vm648 = vcmask 130048
    %v650 = vsel %vm648, %v616, 0
    %v653 = vsel %vm648, %v617, 0
    %v656 = vsel %vm648, %v618, 0
    %v659 = vsel %vm648, %v619, 0
    %v662 = vsel %vm648, %v620, 0
    %v665 = vsel %vm648, %v621, 0
    %v668 = vsel %vm648, %v622, 0
    %v671 = vsel %vm648, %v623, 0
    %v674 = vsel %vm648, %v624, 0
    %v677 = vsel %vm648, %v625, 0
    %v680 = vsel %vm648, %v626, 0
    %v683 = vsel %vm648, %v627, 0
    %v686 = vsel %vm648, %v628, 0
    %v689 = vsel %vm648, %v629, 0
    %v692 = vsel %vm648, %v630, 0
    %v695 = vsel %vm648, %v631, 0
    %v698 = vsel %vm648, %v632, 0
    %v701 = vsel %vm648, %v633, 0
    %v704 = vsel %vm648, %v634, 0
    %v707 = vsel %vm648, %v635, 0
    %v710 = vsel %vm648, %v636, 0
    %v713 = vsel %vm648, %v637, 0
    %v716 = vsel %vm648, %v638, 0
    %v719 = vsel %vm648, %v639, 0
    %v722 = vsel %vm648, %v640, 0
    %v725 = vsel %vm648, %v641, 0
    %v728 = vsel %vm648, %v642, 0
    %v731 = vsel %vm648, %v643, 0
    %v734 = vsel %vm648, %v644, 0
    %v737 = vsel %vm648, %v645, 0
    %v740 = vsel %vm648, %v646, 0
    %v743 = vsel %vm648, %v647, 0
    %745 = vmatprep.subr.bf16.mxu0 0
    %746 = vmatpush1.bf16.msra.mxu0 %v39
    %747 = vmatprep.subr.bf16.mxu0 0
    %748 = vmatpush1.bf16.msra.mxu0 0
    %749 = vmatprep.subr.bf16.mxu0 0
    %750 = vmatpush1.bf16.msra.mxu0 0
    %751 = vmatprep.subr.bf16.mxu0 0
    %752 = vmatpush1.bf16.msra.mxu0 0
    %753 = vmatprep.subr.bf16.mxu0 0
    %754 = vmatpush1.bf16.msra.mxu0 0
    %755 = vmatprep.subr.bf16.mxu0 0
    %756 = vmatpush1.bf16.msra.mxu0 0
    %757 = vmatprep.subr.bf16.mxu0 0
    %758 = vmatpush1.bf16.msra.mxu0 0
    %759 = vmatprep.subr.bf16.mxu0 0
    %760 = vmatpush1.bf16.msra.mxu0 0
    %761 = vmatprep.subr.bf16.mxu0 0
    %762 = vmatpush1.bf16.msra.mxu0 0
    %763 = vmatprep.subr.bf16.mxu0 0
    %764 = vmatpush1.bf16.msra.mxu0 0
    %765 = vmatprep.subr.bf16.mxu0 0
    %766 = vmatpush1.bf16.msra.mxu0 0
    %767 = vmatprep.subr.bf16.mxu0 0
    %768 = vmatpush1.bf16.msra.mxu0 0
    %769 = vmatprep.subr.bf16.mxu0 0
    %770 = vmatpush1.bf16.msra.mxu0 0
    %771 = vmatprep.subr.bf16.mxu0 0
    %772 = vmatpush1.bf16.msra.mxu0 0
    %773 = vmatprep.subr.bf16.mxu0 0
    %774 = vmatpush1.bf16.msra.mxu0 0
    %775 = vmatprep.subr.bf16.mxu0 0
    %776 = vmatpush1.bf16.msra.mxu0 0
    %777 = vmatprep.mubr.bf16.mxu0 0
    %778 = vmatmul.mubr.bf16.gmra.mrb[0].mxu0 %v650
    %v779 = vpop.f32.mrb[0].mxu0
    %v780 = vadd.f32 %v171, %v779
    %v781 = vpop.f32.mrb[0].mxu0
    %v782 = vpop.f32.mrb[0].mxu0
    %v783 = vadd.f32 %v176, %v782
    %v784 = vpop.f32.mrb[0].mxu0
    %785 = vmatprep.mubr.bf16.mxu0 0
    %786 = vmatmul.mubr.bf16.gmra.mrb[0].mxu0 %v653
    %v787 = vpop.f32.mrb[0].mxu0
    %v788 = vadd.f32 %v181, %v787
    %v789 = vpop.f32.mrb[0].mxu0
    %v790 = vpop.f32.mrb[0].mxu0
    %v791 = vadd.f32 %v186, %v790
    %v792 = vpop.f32.mrb[0].mxu0
    %793 = vmatprep.mubr.bf16.mxu0 0
    %794 = vmatmul.mubr.bf16.gmra.mrb[0].mxu0 %v656
    %v795 = vpop.f32.mrb[0].mxu0
    %v796 = vadd.f32 %v191, %v795
    %v797 = vpop.f32.mrb[0].mxu0
    %v798 = vpop.f32.mrb[0].mxu0
    %v799 = vadd.f32 %v196, %v798
    %v800 = vpop.f32.mrb[0].mxu0
    %801 = vmatprep.mubr.bf16.mxu0 0
    %802 = vmatmul.mubr.bf16.gmra.mrb[0].mxu0 %v659
    %v803 = vpop.f32.mrb[0].mxu0
    %v804 = vadd.f32 %v201, %v803
    %v805 = vpop.f32.mrb[0].mxu0
    %v806 = vpop.f32.mrb[0].mxu0
    %v807 = vadd.f32 %v206, %v806
    %v808 = vpop.f32.mrb[0].mxu0
    %809 = vmatprep.mubr.bf16.mxu0 0
    %810 = vmatmul.mubr.bf16.gmra.mrb[0].mxu0 %v662
    %v811 = vpop.f32.mrb[0].mxu0
    %v812 = vadd.f32 %v211, %v811
    %v813 = vpop.f32.mrb[0].mxu0
    %v814 = vpop.f32.mrb[0].mxu0
    %v815 = vadd.f32 %v216, %v814
    %v816 = vpop.f32.mrb[0].mxu0
    %817 = vmatprep.mubr.bf16.mxu0 0
    %818 = vmatmul.mubr.bf16.gmra.mrb[0].mxu0 %v665
    %v819 = vpop.f32.mrb[0].mxu0
    %v820 = vadd.f32 %v221, %v819
    %v821 = vpop.f32.mrb[0].mxu0
    %v822 = vpop.f32.mrb[0].mxu0
    %v823 = vadd.f32 %v226, %v822
    %v824 = vpop.f32.mrb[0].mxu0
    %825 = vmatprep.mubr.bf16.mxu0 0
    %826 = vmatmul.mubr.bf16.gmra.mrb[0].mxu0 %v668
    %v827 = vpop.f32.mrb[0].mxu0
    %v828 = vadd.f32 %v231, %v827
    %v829 = vpop.f32.mrb[0].mxu0
    %v830 = vpop.f32.mrb[0].mxu0
    %v831 = vadd.f32 %v236, %v830
    %v832 = vpop.f32.mrb[0].mxu0
    %833 = vmatprep.mubr.bf16.mxu0 0
    %834 = vmatmul.mubr.bf16.gmra.mrb[0].mxu0 %v671
    %v835 = vpop.f32.mrb[0].mxu0
    %v836 = vadd.f32 %v241, %v835
    %v837 = vpop.f32.mrb[0].mxu0
    %v838 = vpop.f32.mrb[0].mxu0
    %v839 = vadd.f32 %v246, %v838
    %v840 = vpop.f32.mrb[0].mxu0
    %841 = vmatprep.mubr.bf16.mxu0 0
    %842 = vmatmul.mubr.bf16.gmra.mrb[0].mxu0 %v674
    %v843 = vpop.f32.mrb[0].mxu0
    %v844 = vadd.f32 %v251, %v843
    %v845 = vpop.f32.mrb[0].mxu0
    %v846 = vpop.f32.mrb[0].mxu0
    %v847 = vadd.f32 %v256, %v846
    %v848 = vpop.f32.mrb[0].mxu0
    %849 = vmatprep.mubr.bf16.mxu0 0
    %850 = vmatmul.mubr.bf16.gmra.mrb[0].mxu0 %v677
    %v851 = vpop.f32.mrb[0].mxu0
    %v852 = vadd.f32 %v261, %v851
    %v853 = vpop.f32.mrb[0].mxu0
    %v854 = vpop.f32.mrb[0].mxu0
    %v855 = vadd.f32 %v266, %v854
    %v856 = vpop.f32.mrb[0].mxu0
    %857 = vmatprep.mubr.bf16.mxu0 0
    %858 = vmatmul.mubr.bf16.gmra.mrb[0].mxu0 %v680
    %v859 = vpop.f32.mrb[0].mxu0
    %v860 = vadd.f32 %v271, %v859
    %v861 = vpop.f32.mrb[0].mxu0
    %v862 = vpop.f32.mrb[0].mxu0
    %v863 = vadd.f32 %v276, %v862
    %v864 = vpop.f32.mrb[0].mxu0
    %865 = vmatprep.mubr.bf16.mxu0 0
    %866 = vmatmul.mubr.bf16.gmra.mrb[0].mxu0 %v683
    %v867 = vpop.f32.mrb[0].mxu0
    %v868 = vadd.f32 %v281, %v867
    %v869 = vpop.f32.mrb[0].mxu0
    %v870 = vpop.f32.mrb[0].mxu0
    %v871 = vadd.f32 %v286, %v870
    %v872 = vpop.f32.mrb[0].mxu0
    %873 = vmatprep.mubr.bf16.mxu0 0
    %874 = vmatmul.mubr.bf16.gmra.mrb[0].mxu0 %v686
    %v875 = vpop.f32.mrb[0].mxu0
    %v876 = vadd.f32 %v291, %v875
    %v877 = vpop.f32.mrb[0].mxu0
    %v878 = vpop.f32.mrb[0].mxu0
    %v879 = vadd.f32 %v296, %v878
    %v880 = vpop.f32.mrb[0].mxu0
    %881 = vmatprep.mubr.bf16.mxu0 0
    %882 = vmatmul.mubr.bf16.gmra.mrb[0].mxu0 %v689
    %v883 = vpop.f32.mrb[0].mxu0
    %v884 = vadd.f32 %v301, %v883
    %v885 = vpop.f32.mrb[0].mxu0
    %v886 = vpop.f32.mrb[0].mxu0
    %v887 = vadd.f32 %v306, %v886
    %v888 = vpop.f32.mrb[0].mxu0
    %889 = vmatprep.mubr.bf16.mxu0 0
    %890 = vmatmul.mubr.bf16.gmra.mrb[0].mxu0 %v692
    %v891 = vpop.f32.mrb[0].mxu0
    %v892 = vadd.f32 %v311, %v891
    %v893 = vpop.f32.mrb[0].mxu0
    %v894 = vpop.f32.mrb[0].mxu0
    %v895 = vadd.f32 %v316, %v894
    %v896 = vpop.f32.mrb[0].mxu0
    %897 = vmatprep.mubr.bf16.mxu0 0
    %898 = vmatmul.mubr.bf16.gmra.mrb[0].mxu0 %v695
    %v899 = vpop.f32.mrb[0].mxu0
    %v900 = vadd.f32 %v321, %v899
    %v901 = vpop.f32.mrb[0].mxu0
    %v902 = vpop.f32.mrb[0].mxu0
    %v903 = vadd.f32 %v326, %v902
    %v904 = vpop.f32.mrb[0].mxu0
    %905 = vmatprep.mubr.bf16.mxu0 0
    %906 = vmatmul.mubr.bf16.gmra.mrb[0].mxu0 %v698
    %v907 = vpop.f32.mrb[0].mxu0
    %v908 = vadd.f32 %v331, %v907
    %v909 = vpop.f32.mrb[0].mxu0
    %v910 = vpop.f32.mrb[0].mxu0
    %v911 = vadd.f32 %v336, %v910
    %v912 = vpop.f32.mrb[0].mxu0
    %913 = vmatprep.mubr.bf16.mxu0 0
    %914 = vmatmul.mubr.bf16.gmra.mrb[0].mxu0 %v701
    %v915 = vpop.f32.mrb[0].mxu0
    %v916 = vadd.f32 %v341, %v915
    %v917 = vpop.f32.mrb[0].mxu0
    %v918 = vpop.f32.mrb[0].mxu0
    %v919 = vadd.f32 %v346, %v918
    %v920 = vpop.f32.mrb[0].mxu0
    %921 = vmatprep.mubr.bf16.mxu0 0
    %922 = vmatmul.mubr.bf16.gmra.mrb[0].mxu0 %v704
    %v923 = vpop.f32.mrb[0].mxu0
    %v924 = vadd.f32 %v351, %v923
    %v925 = vpop.f32.mrb[0].mxu0
    %v926 = vpop.f32.mrb[0].mxu0
    %v927 = vadd.f32 %v356, %v926
    %v928 = vpop.f32.mrb[0].mxu0
    %929 = vmatprep.mubr.bf16.mxu0 0
    %930 = vmatmul.mubr.bf16.gmra.mrb[0].mxu0 %v707
    %v931 = vpop.f32.mrb[0].mxu0
    %v932 = vadd.f32 %v361, %v931
    %v933 = vpop.f32.mrb[0].mxu0
    %v934 = vpop.f32.mrb[0].mxu0
    %v935 = vadd.f32 %v366, %v934
    %v936 = vpop.f32.mrb[0].mxu0
    %937 = vmatprep.mubr.bf16.mxu0 0
    %938 = vmatmul.mubr.bf16.gmra.mrb[0].mxu0 %v710
    %v939 = vpop.f32.mrb[0].mxu0
    %v940 = vadd.f32 %v371, %v939
    %v941 = vpop.f32.mrb[0].mxu0
    %v942 = vpop.f32.mrb[0].mxu0
    %v943 = vadd.f32 %v376, %v942
    %v944 = vpop.f32.mrb[0].mxu0
    %945 = vmatprep.mubr.bf16.mxu0 0
    %946 = vmatmul.mubr.bf16.gmra.mrb[0].mxu0 %v713
    %v947 = vpop.f32.mrb[0].mxu0
    %v948 = vadd.f32 %v381, %v947
    %v949 = vpop.f32.mrb[0].mxu0
    %v950 = vpop.f32.mrb[0].mxu0
    %v951 = vadd.f32 %v386, %v950
    %v952 = vpop.f32.mrb[0].mxu0
    %953 = vmatprep.mubr.bf16.mxu0 0
    %954 = vmatmul.mubr.bf16.gmra.mrb[0].mxu0 %v716
    %v955 = vpop.f32.mrb[0].mxu0
    %v956 = vadd.f32 %v391, %v955
    %v957 = vpop.f32.mrb[0].mxu0
    %v958 = vpop.f32.mrb[0].mxu0
    %v959 = vadd.f32 %v396, %v958
    %v960 = vpop.f32.mrb[0].mxu0
    %961 = vmatprep.mubr.bf16.mxu0 0
    %962 = vmatmul.mubr.bf16.gmra.mrb[0].mxu0 %v719
    %v963 = vpop.f32.mrb[0].mxu0
    %v964 = vadd.f32 %v401, %v963
    %v965 = vpop.f32.mrb[0].mxu0
    %v966 = vpop.f32.mrb[0].mxu0
    %v967 = vadd.f32 %v406, %v966
    %v968 = vpop.f32.mrb[0].mxu0
    %969 = vmatprep.mubr.bf16.mxu0 0
    %970 = vmatmul.mubr.bf16.gmra.mrb[0].mxu0 %v722
    %v971 = vpop.f32.mrb[0].mxu0
    %v972 = vadd.f32 %v411, %v971
    %v973 = vpop.f32.mrb[0].mxu0
    %v974 = vpop.f32.mrb[0].mxu0
    %v975 = vadd.f32 %v416, %v974
    %v976 = vpop.f32.mrb[0].mxu0
    %977 = vmatprep.mubr.bf16.mxu0 0
    %978 = vmatmul.mubr.bf16.gmra.mrb[0].mxu0 %v725
    %v979 = vpop.f32.mrb[0].mxu0
    %v980 = vadd.f32 %v421, %v979
    %v981 = vpop.f32.mrb[0].mxu0
    %v982 = vpop.f32.mrb[0].mxu0
    %v983 = vadd.f32 %v426, %v982
    %v984 = vpop.f32.mrb[0].mxu0
    %985 = vmatprep.mubr.bf16.mxu0 0
    %986 = vmatmul.mubr.bf16.gmra.mrb[0].mxu0 %v728
    %v987 = vpop.f32.mrb[0].mxu0
    %v988 = vadd.f32 %v431, %v987
    %v989 = vpop.f32.mrb[0].mxu0
    %v990 = vpop.f32.mrb[0].mxu0
    %v991 = vadd.f32 %v436, %v990
    %v992 = vpop.f32.mrb[0].mxu0
    %993 = vmatprep.mubr.bf16.mxu0 0
    %994 = vmatmul.mubr.bf16.gmra.mrb[0].mxu0 %v731
    %v995 = vpop.f32.mrb[0].mxu0
    %v996 = vadd.f32 %v441, %v995
    %v997 = vpop.f32.mrb[0].mxu0
    %v998 = vpop.f32.mrb[0].mxu0
    %v999 = vadd.f32 %v446, %v998
    %v1000 = vpop.f32.mrb[0].mxu0
    %1001 = vmatprep.mubr.bf16.mxu0 0
    %1002 = vmatmul.mubr.bf16.gmra.mrb[0].mxu0 %v734
    %v1003 = vpop.f32.mrb[0].mxu0
    %v1004 = vadd.f32 %v451, %v1003
    %v1005 = vpop.f32.mrb[0].mxu0
    %v1006 = vpop.f32.mrb[0].mxu0
    %v1007 = vadd.f32 %v456, %v1006
    %v1008 = vpop.f32.mrb[0].mxu0
    %1009 = vmatprep.mubr.bf16.mxu0 0
    %1010 = vmatmul.mubr.bf16.gmra.mrb[0].mxu0 %v737
    %v1011 = vpop.f32.mrb[0].mxu0
    %v1012 = vadd.f32 %v461, %v1011
    %v1013 = vpop.f32.mrb[0].mxu0
    %v1014 = vpop.f32.mrb[0].mxu0
    %v1015 = vadd.f32 %v466, %v1014
    %v1016 = vpop.f32.mrb[0].mxu0
    %1017 = vmatprep.mubr.bf16.mxu0 0
    %1018 = vmatmul.mubr.bf16.gmra.mrb[0].mxu0 %v740
    %v1019 = vpop.f32.mrb[0].mxu0
    %v1020 = vadd.f32 %v471, %v1019
    %v1021 = vpop.f32.mrb[0].mxu0
    %v1022 = vpop.f32.mrb[0].mxu0
    %v1023 = vadd.f32 %v476, %v1022
    %v1024 = vpop.f32.mrb[0].mxu0
    %1025 = vmatprep.mubr.bf16.mxu0 0
    %1026 = vmatmul.mubr.bf16.gmra.mrb[0].mxu0 %v743
    %v1027 = vpop.f32.mrb[0].mxu0
    %v1028 = vadd.f32 %v481, %v1027
    %v1029 = vpop.f32.mrb[0].mxu0
    %v1030 = vpop.f32.mrb[0].mxu0
    %v1031 = vadd.f32 %v486, %v1030
    %v1032 = vpop.f32.mrb[0].mxu0
    %1033 = vdwg.mxu0
    %v1034 = vmax.f32 %v780, 0.0
    %v1035 = vmax.f32 %v783, 0.0
    %v1036 = vmax.f32 %v788, 0.0
    %v1037 = vmax.f32 %v791, 0.0
    %v1038 = vmax.f32 %v796, 0.0
    %v1039 = vmax.f32 %v799, 0.0
    %v1040 = vmax.f32 %v804, 0.0
    %v1041 = vmax.f32 %v807, 0.0
    %v1042 = vmax.f32 %v812, 0.0
    %v1043 = vmax.f32 %v815, 0.0
    %v1044 = vmax.f32 %v820, 0.0
    %v1045 = vmax.f32 %v823, 0.0
    %v1046 = vmax.f32 %v828, 0.0
    %v1047 = vmax.f32 %v831, 0.0
    %v1048 = vmax.f32 %v836, 0.0
    %v1049 = vmax.f32 %v839, 0.0
    %v1050 = vmax.f32 %v844, 0.0
    %v1051 = vmax.f32 %v847, 0.0
    %v1052 = vmax.f32 %v852, 0.0
    %v1053 = vmax.f32 %v855, 0.0
    %v1054 = vmax.f32 %v860, 0.0
    %v1055 = vmax.f32 %v863, 0.0
    %v1056 = vmax.f32 %v868, 0.0
    %v1057 = vmax.f32 %v871, 0.0
    %v1058 = vmax.f32 %v876, 0.0
    %v1059 = vmax.f32 %v879, 0.0
    %v1060 = vmax.f32 %v884, 0.0
    %v1061 = vmax.f32 %v887, 0.0
    %v1062 = vmax.f32 %v892, 0.0
    %v1063 = vmax.f32 %v895, 0.0
    %v1064 = vmax.f32 %v900, 0.0
    %v1065 = vmax.f32 %v903, 0.0
    %v1066 = vmax.f32 %v908, 0.0
    %v1067 = vmax.f32 %v911, 0.0
    %v1068 = vmax.f32 %v916, 0.0
    %v1069 = vmax.f32 %v919, 0.0
    %v1070 = vmax.f32 %v924, 0.0
    %v1071 = vmax.f32 %v927, 0.0
    %v1072 = vmax.f32 %v932, 0.0
    %v1073 = vmax.f32 %v935, 0.0
    %v1074 = vmax.f32 %v940, 0.0
    %v1075 = vmax.f32 %v943, 0.0
    %v1076 = vmax.f32 %v948, 0.0
    %v1077 = vmax.f32 %v951, 0.0
    %v1078 = vmax.f32 %v956, 0.0
    %v1079 = vmax.f32 %v959, 0.0
    %v1080 = vmax.f32 %v964, 0.0
    %v1081 = vmax.f32 %v967, 0.0
    %v1082 = vmax.f32 %v972, 0.0
    %v1083 = vmax.f32 %v975, 0.0
    %v1084 = vmax.f32 %v980, 0.0
    %v1085 = vmax.f32 %v983, 0.0
    %v1086 = vmax.f32 %v988, 0.0
    %v1087 = vmax.f32 %v991, 0.0
    %v1088 = vmax.f32 %v996, 0.0
    %v1089 = vmax.f32 %v999, 0.0
    %v1090 = vmax.f32 %v1004, 0.0
    %v1091 = vmax.f32 %v1007, 0.0
    %v1092 = vmax.f32 %v1012, 0.0
    %v1093 = vmax.f32 %v1015, 0.0
    %v1094 = vmax.f32 %v1020, 0.0
    %v1095 = vmax.f32 %v1023, 0.0
    %v1096 = vmax.f32 %v1028, 0.0
    %v1097 = vmax.f32 %v1031, 0.0
    %v1098 = vpack.c.bf16 %v1035, %v1034
    %v1099 = vpack.c.bf16 %v1037, %v1036
    %v1100 = vpack.c.bf16 %v1039, %v1038
    %v1101 = vpack.c.bf16 %v1041, %v1040
    %v1102 = vpack.c.bf16 %v1043, %v1042
    %v1103 = vpack.c.bf16 %v1045, %v1044
    %v1104 = vpack.c.bf16 %v1047, %v1046
    %v1105 = vpack.c.bf16 %v1049, %v1048
    %v1106 = vpack.c.bf16 %v1051, %v1050
    %v1107 = vpack.c.bf16 %v1053, %v1052
    %v1108 = vpack.c.bf16 %v1055, %v1054
    %v1109 = vpack.c.bf16 %v1057, %v1056
    %v1110 = vpack.c.bf16 %v1059, %v1058
    %v1111 = vpack.c.bf16 %v1061, %v1060
    %v1112 = vpack.c.bf16 %v1063, %v1062
    %v1113 = vpack.c.bf16 %v1065, %v1064
    %v1114 = vpack.c.bf16 %v1067, %v1066
    %v1115 = vpack.c.bf16 %v1069, %v1068
    %v1116 = vpack.c.bf16 %v1071, %v1070
    %v1117 = vpack.c.bf16 %v1073, %v1072
    %v1118 = vpack.c.bf16 %v1075, %v1074
    %v1119 = vpack.c.bf16 %v1077, %v1076
    %v1120 = vpack.c.bf16 %v1079, %v1078
    %v1121 = vpack.c.bf16 %v1081, %v1080
    %v1122 = vpack.c.bf16 %v1083, %v1082
    %v1123 = vpack.c.bf16 %v1085, %v1084
    %v1124 = vpack.c.bf16 %v1087, %v1086
    %v1125 = vpack.c.bf16 %v1089, %v1088
    %v1126 = vpack.c.bf16 %v1091, %v1090
    %v1127 = vpack.c.bf16 %v1093, %v1092
    %v1128 = vpack.c.bf16 %v1095, %v1094
    %v1129 = vpack.c.bf16 %v1097, %v1096
    %v1130 = vld [vmem:[%s3] sm:$0xff]
    %v1131 = vld [vmem:[%s3 + $0x8] sm:$0xff]
    %v1132 = vld [vmem:[%s3 + $0x10] sm:$0xff]
    %v1133 = vld [vmem:[%s3 + $0x18] sm:$0xff]
    %v1134 = vld [vmem:[%s3 + $0x20] sm:$0xff]
    %v1135 = vld [vmem:[%s3 + $0x28] sm:$0xff]
    %v1136 = vld [vmem:[%s3 + $0x30] sm:$0xff]
    %v1137 = vld [vmem:[%s3 + $0x38] sm:$0xff]
    %v1138 = vld [vmem:[%s3 + $0x40] sm:$0xff]
    %v1139 = vld [vmem:[%s3 + $0x48] sm:$0xff]
    %v1140 = vld [vmem:[%s3 + $0x50] sm:$0xff]
    %v1141 = vld [vmem:[%s3 + $0x58] sm:$0xff]
    %v1142 = vld [vmem:[%s3 + $0x60] sm:$0xff]
    %v1143 = vld [vmem:[%s3 + $0x68] sm:$0xff]
    %v1144 = vld [vmem:[%s3 + $0x70] sm:$0xff]
    %v1145 = vld [vmem:[%s3 + $0x78] sm:$0xff]
    %v1146 = vld [vmem:[%s3 + $0x80] sm:$0xff]
    %v1147 = vld [vmem:[%s3 + $0x88] sm:$0xff]
    %v1148 = vld [vmem:[%s3 + $0x90] sm:$0xff]
    %v1149 = vld [vmem:[%s3 + $0x98] sm:$0xff]
    %v1150 = vld [vmem:[%s3 + $0xa0] sm:$0xff]
    %v1151 = vld [vmem:[%s3 + $0xa8] sm:$0xff]
    %v1152 = vld [vmem:[%s3 + $0xb0] sm:$0xff]
    %v1153 = vld [vmem:[%s3 + $0xb8] sm:$0xff]
    %v1154 = vld [vmem:[%s3 + $0xc0] sm:$0xff]
    %v1155 = vld [vmem:[%s3 + $0xc8] sm:$0xff]
    %v1156 = vld [vmem:[%s3 + $0xd0] sm:$0xff]
    %v1157 = vld [vmem:[%s3 + $0xd8] sm:$0xff]
    %v1158 = vld [vmem:[%s3 + $0xe0] sm:$0xff]
    %v1159 = vld [vmem:[%s3 + $0xe8] sm:$0xff]
    %v1160 = vld [vmem:[%s3 + $0xf0] sm:$0xff]
    %v1161 = vld [vmem:[%s3 + $0xf8] sm:$0xff]
    %v1162 = vld [vmem:[%s4] sm:$0xff]
    %v1163 = vld [vmem:[%s4 + $0x8] sm:$0xff]
    %v1164 = vld [vmem:[%s4 + $0x10] sm:$0xff]
    %v1165 = vld [vmem:[%s4 + $0x18] sm:$0xff]
    %v1166 = vld [vmem:[%s4 + $0x20] sm:$0xff]
    %v1167 = vld [vmem:[%s4 + $0x28] sm:$0xff]
    %v1168 = vld [vmem:[%s4 + $0x30] sm:$0xff]
    %v1169 = vld [vmem:[%s4 + $0x38] sm:$0xff]
    %v1170 = vld [vmem:[%s4 + $0x40] sm:$0xff]
    %v1171 = vld [vmem:[%s4 + $0x48] sm:$0xff]
    %v1172 = vld [vmem:[%s4 + $0x50] sm:$0xff]
    %v1173 = vld [vmem:[%s4 + $0x58] sm:$0xff]
    %v1174 = vld [vmem:[%s4 + $0x60] sm:$0xff]
    %v1175 = vld [vmem:[%s4 + $0x68] sm:$0xff]
    %v1176 = vld [vmem:[%s4 + $0x70] sm:$0xff]
    %v1177 = vld [vmem:[%s4 + $0x78] sm:$0xff]
    %v1178 = vld [vmem:[%s4 + $0x80] sm:$0xff]
    %v1179 = vld [vmem:[%s4 + $0x88] sm:$0xff]
    %v1180 = vld [vmem:[%s4 + $0x90] sm:$0xff]
    %v1181 = vld [vmem:[%s4 + $0x98] sm:$0xff]
    %v1182 = vld [vmem:[%s4 + $0xa0] sm:$0xff]
    %v1183 = vld [vmem:[%s4 + $0xa8] sm:$0xff]
    %v1184 = vld [vmem:[%s4 + $0xb0] sm:$0xff]
    %v1185 = vld [vmem:[%s4 + $0xb8] sm:$0xff]
    %v1186 = vld [vmem:[%s4 + $0xc0] sm:$0xff]
    %v1187 = vld [vmem:[%s4 + $0xc8] sm:$0xff]
    %v1188 = vld [vmem:[%s4 + $0xd0] sm:$0xff]
    %v1189 = vld [vmem:[%s4 + $0xd8] sm:$0xff]
    %v1190 = vld [vmem:[%s4 + $0xe0] sm:$0xff]
    %v1191 = vld [vmem:[%s4 + $0xe8] sm:$0xff]
    %v1192 = vld [vmem:[%s4 + $0xf0] sm:$0xff]
    %v1193 = vld [vmem:[%s4 + $0xf8] sm:$0xff]
    %1195 = vset.pattern.permute.xlu0 0
    %1196 = vperm.xlu0 %1195, %v1162
    %v1197 = vpop.permute.xlu0 %1196
    %1200 = vset.pattern.permute.xlu0 0
    %1201 = vperm.xlu0 %1200, %v1163
    %v1202 = vpop.permute.xlu0 %1201
    %1205 = vset.pattern.permute.xlu0 0
    %1206 = vperm.xlu0 %1205, %v1164
    %v1207 = vpop.permute.xlu0 %1206
    %1210 = vset.pattern.permute.xlu0 0
    %1211 = vperm.xlu0 %1210, %v1165
    %v1212 = vpop.permute.xlu0 %1211
    %1215 = vset.pattern.permute.xlu0 0
    %1216 = vperm.xlu0 %1215, %v1166
    %v1217 = vpop.permute.xlu0 %1216
    %1220 = vset.pattern.permute.xlu0 0
    %1221 = vperm.xlu0 %1220, %v1167
    %v1222 = vpop.permute.xlu0 %1221
    %1225 = vset.pattern.permute.xlu0 0
    %1226 = vperm.xlu0 %1225, %v1168
    %v1227 = vpop.permute.xlu0 %1226
    %1230 = vset.pattern.permute.xlu0 0
    %1231 = vperm.xlu0 %1230, %v1169
    %v1232 = vpop.permute.xlu0 %1231
    %1235 = vset.pattern.permute.xlu0 0
    %1236 = vperm.xlu0 %1235, %v1170
    %v1237 = vpop.permute.xlu0 %1236
    %1240 = vset.pattern.permute.xlu0 0
    %1241 = vperm.xlu0 %1240, %v1171
    %v1242 = vpop.permute.xlu0 %1241
    %1245 = vset.pattern.permute.xlu0 0
    %1246 = vperm.xlu0 %1245, %v1172
    %v1247 = vpop.permute.xlu0 %1246
    %1250 = vset.pattern.permute.xlu0 0
    %1251 = vperm.xlu0 %1250, %v1173
    %v1252 = vpop.permute.xlu0 %1251
    %1255 = vset.pattern.permute.xlu0 0
    %1256 = vperm.xlu0 %1255, %v1174
    %v1257 = vpop.permute.xlu0 %1256
    %1260 = vset.pattern.permute.xlu0 0
    %1261 = vperm.xlu0 %1260, %v1175
    %v1262 = vpop.permute.xlu0 %1261
    %1265 = vset.pattern.permute.xlu0 0
    %1266 = vperm.xlu0 %1265, %v1176
    %v1267 = vpop.permute.xlu0 %1266
    %1270 = vset.pattern.permute.xlu0 0
    %1271 = vperm.xlu0 %1270, %v1177
    %v1272 = vpop.permute.xlu0 %1271
    %1275 = vset.pattern.permute.xlu0 0
    %1276 = vperm.xlu0 %1275, %v1178
    %v1277 = vpop.permute.xlu0 %1276
    %1280 = vset.pattern.permute.xlu0 0
    %1281 = vperm.xlu0 %1280, %v1179
    %v1282 = vpop.permute.xlu0 %1281
    %1285 = vset.pattern.permute.xlu0 0
    %1286 = vperm.xlu0 %1285, %v1180
    %v1287 = vpop.permute.xlu0 %1286
    %1290 = vset.pattern.permute.xlu0 0
    %1291 = vperm.xlu0 %1290, %v1181
    %v1292 = vpop.permute.xlu0 %1291
    %1295 = vset.pattern.permute.xlu0 0
    %1296 = vperm.xlu0 %1295, %v1182
    %v1297 = vpop.permute.xlu0 %1296
    %1300 = vset.pattern.permute.xlu0 0
    %1301 = vperm.xlu0 %1300, %v1183
    %v1302 = vpop.permute.xlu0 %1301
    %1305 = vset.pattern.permute.xlu0 0
    %1306 = vperm.xlu0 %1305, %v1184
    %v1307 = vpop.permute.xlu0 %1306
    %1310 = vset.pattern.permute.xlu0 0
    %1311 = vperm.xlu0 %1310, %v1185
    %v1312 = vpop.permute.xlu0 %1311
    %1315 = vset.pattern.permute.xlu0 0
    %1316 = vperm.xlu0 %1315, %v1186
    %v1317 = vpop.permute.xlu0 %1316
    %1320 = vset.pattern.permute.xlu0 0
    %1321 = vperm.xlu0 %1320, %v1187
    %v1322 = vpop.permute.xlu0 %1321
    %1325 = vset.pattern.permute.xlu0 0
    %1326 = vperm.xlu0 %1325, %v1188
    %v1327 = vpop.permute.xlu0 %1326
    %1330 = vset.pattern.permute.xlu0 0
    %1331 = vperm.xlu0 %1330, %v1189
    %v1332 = vpop.permute.xlu0 %1331
    %1335 = vset.pattern.permute.xlu0 0
    %1336 = vperm.xlu0 %1335, %v1190
    %v1337 = vpop.permute.xlu0 %1336
    %1340 = vset.pattern.permute.xlu0 0
    %1341 = vperm.xlu0 %1340, %v1191
    %v1342 = vpop.permute.xlu0 %1341
    %1345 = vset.pattern.permute.xlu0 0
    %1346 = vperm.xlu0 %1345, %v1192
    %v1347 = vpop.permute.xlu0 %1346
    %1350 = vset.pattern.permute.xlu0 0
    %1351 = vperm.xlu0 %1350, %v1193
    %v1352 = vpop.permute.xlu0 %1351
    %v1386 = vunpack.c.l.b16 %v1130
    %v1387 = vunpack.c.h.b16 %v1130
    %v1388 = vunpack.c.l.b16 %v1131
    %v1389 = vunpack.c.h.b16 %v1131
    %v1390 = vunpack.c.l.b16 %v1132
    %v1391 = vunpack.c.h.b16 %v1132
    %v1392 = vunpack.c.l.b16 %v1133
    %v1393 = vunpack.c.h.b16 %v1133
    %v1394 = vunpack.c.l.b16 %v1134
    %v1395 = vunpack.c.h.b16 %v1134
    %v1396 = vunpack.c.l.b16 %v1135
    %v1397 = vunpack.c.h.b16 %v1135
    %v1398 = vunpack.c.l.b16 %v1136
    %v1399 = vunpack.c.h.b16 %v1136
    %v1400 = vunpack.c.l.b16 %v1137
    %v1401 = vunpack.c.h.b16 %v1137
    %v1402 = vunpack.c.l.b16 %v1138
    %v1403 = vunpack.c.h.b16 %v1138
    %v1404 = vunpack.c.l.b16 %v1139
    %v1405 = vunpack.c.h.b16 %v1139
    %v1406 = vunpack.c.l.b16 %v1140
    %v1407 = vunpack.c.h.b16 %v1140
    %v1408 = vunpack.c.l.b16 %v1141
    %v1409 = vunpack.c.h.b16 %v1141
    %v1410 = vunpack.c.l.b16 %v1142
    %v1411 = vunpack.c.h.b16 %v1142
    %v1412 = vunpack.c.l.b16 %v1143
    %v1413 = vunpack.c.h.b16 %v1143
    %v1414 = vunpack.c.l.b16 %v1144
    %v1415 = vunpack.c.h.b16 %v1144
    %v1416 = vunpack.c.l.b16 %v1145
    %v1417 = vunpack.c.h.b16 %v1145
    %v1418 = vunpack.c.l.b16 %v1146
    %v1419 = vunpack.c.h.b16 %v1146
    %v1420 = vunpack.c.l.b16 %v1147
    %v1421 = vunpack.c.h.b16 %v1147
    %v1422 = vunpack.c.l.b16 %v1148
    %v1423 = vunpack.c.h.b16 %v1148
    %v1424 = vunpack.c.l.b16 %v1149
    %v1425 = vunpack.c.h.b16 %v1149
    %v1426 = vunpack.c.l.b16 %v1150
    %v1427 = vunpack.c.h.b16 %v1150
    %v1428 = vunpack.c.l.b16 %v1151
    %v1429 = vunpack.c.h.b16 %v1151
    %v1430 = vunpack.c.l.b16 %v1152
    %v1431 = vunpack.c.h.b16 %v1152
    %v1432 = vunpack.c.l.b16 %v1153
    %v1433 = vunpack.c.h.b16 %v1153
    %v1434 = vunpack.c.l.b16 %v1154
    %v1435 = vunpack.c.h.b16 %v1154
    %v1436 = vunpack.c.l.b16 %v1155
    %v1437 = vunpack.c.h.b16 %v1155
    %v1438 = vunpack.c.l.b16 %v1156
    %v1439 = vunpack.c.h.b16 %v1156
    %v1440 = vunpack.c.l.b16 %v1157
    %v1441 = vunpack.c.h.b16 %v1157
    %v1442 = vunpack.c.l.b16 %v1158
    %v1443 = vunpack.c.h.b16 %v1158
    %v1444 = vunpack.c.l.b16 %v1159
    %v1445 = vunpack.c.h.b16 %v1159
    %v1446 = vunpack.c.l.b16 %v1160
    %v1447 = vunpack.c.h.b16 %v1160
    %v1448 = vunpack.c.l.b16 %v1161
    %v1449 = vunpack.c.h.b16 %v1161
    %v1450 = vpack.c.b16 %v1388, %v1386
    %v1451 = vpack.c.b16 %v1389, %v1387
    %v1452 = vpack.c.b16 %v1392, %v1390
    %v1453 = vpack.c.b16 %v1393, %v1391
    %v1454 = vpack.c.b16 %v1396, %v1394
    %v1455 = vpack.c.b16 %v1397, %v1395
    %v1456 = vpack.c.b16 %v1400, %v1398
    %v1457 = vpack.c.b16 %v1401, %v1399
    %v1458 = vpack.c.b16 %v1404, %v1402
    %v1459 = vpack.c.b16 %v1405, %v1403
    %v1460 = vpack.c.b16 %v1408, %v1406
    %v1461 = vpack.c.b16 %v1409, %v1407
    %v1462 = vpack.c.b16 %v1412, %v1410
    %v1463 = vpack.c.b16 %v1413, %v1411
    %v1464 = vpack.c.b16 %v1416, %v1414
    %v1465 = vpack.c.b16 %v1417, %v1415
    %v1466 = vpack.c.b16 %v1420, %v1418
    %v1467 = vpack.c.b16 %v1421, %v1419
    %v1468 = vpack.c.b16 %v1424, %v1422
    %v1469 = vpack.c.b16 %v1425, %v1423
    %v1470 = vpack.c.b16 %v1428, %v1426
    %v1471 = vpack.c.b16 %v1429, %v1427
    %v1472 = vpack.c.b16 %v1432, %v1430
    %v1473 = vpack.c.b16 %v1433, %v1431
    %v1474 = vpack.c.b16 %v1436, %v1434
    %v1475 = vpack.c.b16 %v1437, %v1435
    %v1476 = vpack.c.b16 %v1440, %v1438
    %v1477 = vpack.c.b16 %v1441, %v1439
    %v1478 = vpack.c.b16 %v1444, %v1442
    %v1479 = vpack.c.b16 %v1445, %v1443
    %v1480 = vpack.c.b16 %v1448, %v1446
    %v1481 = vpack.c.b16 %v1449, %v1447
    %1514 = vmatprep.subr.bf16.mxu0 0
    %1515 = vmatpush1.bf16.msra.mxu0 %v1098
    %1516 = vmatprep.subr.bf16.mxu0 0
    %1517 = vmatpush1.bf16.msra.mxu0 %v1099
    %1518 = vmatprep.subr.bf16.mxu0 0
    %1519 = vmatpush1.bf16.msra.mxu0 %v1100
    %1520 = vmatprep.subr.bf16.mxu0 0
    %1521 = vmatpush1.bf16.msra.mxu0 %v1101
    %1522 = vmatprep.subr.bf16.mxu0 0
    %1523 = vmatpush1.bf16.msra.mxu0 %v1102
    %1524 = vmatprep.subr.bf16.mxu0 0
    %1525 = vmatpush1.bf16.msra.mxu0 %v1103
    %1526 = vmatprep.subr.bf16.mxu0 0
    %1527 = vmatpush1.bf16.msra.mxu0 %v1104
    %1528 = vmatprep.subr.bf16.mxu0 0
    %1529 = vmatpush1.bf16.msra.mxu0 %v1105
    %1530 = vmatprep.subr.bf16.mxu0 0
    %1531 = vmatpush1.bf16.msra.mxu0 %v1106
    %1532 = vmatprep.subr.bf16.mxu0 0
    %1533 = vmatpush1.bf16.msra.mxu0 %v1107
    %1534 = vmatprep.subr.bf16.mxu0 0
    %1535 = vmatpush1.bf16.msra.mxu0 %v1108
    %1536 = vmatprep.subr.bf16.mxu0 0
    %1537 = vmatpush1.bf16.msra.mxu0 %v1109
    %1538 = vmatprep.subr.bf16.mxu0 0
    %1539 = vmatpush1.bf16.msra.mxu0 %v1110
    %1540 = vmatprep.subr.bf16.mxu0 0
    %1541 = vmatpush1.bf16.msra.mxu0 %v1111
    %1542 = vmatprep.subr.bf16.mxu0 0
    %1543 = vmatpush1.bf16.msra.mxu0 %v1112
    %1544 = vmatprep.subr.bf16.mxu0 0
    %1545 = vmatpush1.bf16.msra.mxu0 %v1113
    %1546 = vmatprep.mubr.bf16.mxu0 %v1451
    %1547 = vmatmul.mubr.bf16.gmra.mrb[0].mxu0 %v1450
    %v1548 = vpop.f32.mrb[0].mxu0
    %v1549 = vadd.f32 %v1197, %v1548
    %v1550 = vpop.f32.mrb[0].mxu0
    %v1551 = vpop.f32.mrb[0].mxu0
    %v1552 = vadd.f32 %v1202, %v1551
    %v1553 = vpop.f32.mrb[0].mxu0
    %1554 = vmatprep.mubr.bf16.mxu0 %v1453
    %1555 = vmatmul.mubr.bf16.gmra.mrb[0].mxu0 %v1452
    %v1556 = vpop.f32.mrb[0].mxu0
    %v1557 = vadd.f32 %v1207, %v1556
    %v1558 = vpop.f32.mrb[0].mxu0
    %v1559 = vpop.f32.mrb[0].mxu0
    %v1560 = vadd.f32 %v1212, %v1559
    %v1561 = vpop.f32.mrb[0].mxu0
    %1562 = vmatprep.mubr.bf16.mxu0 %v1455
    %1563 = vmatmul.mubr.bf16.gmra.mrb[0].mxu0 %v1454
    %v1564 = vpop.f32.mrb[0].mxu0
    %v1565 = vadd.f32 %v1217, %v1564
    %v1566 = vpop.f32.mrb[0].mxu0
    %v1567 = vpop.f32.mrb[0].mxu0
    %v1568 = vadd.f32 %v1222, %v1567
    %v1569 = vpop.f32.mrb[0].mxu0
    %1570 = vmatprep.mubr.bf16.mxu0 %v1457
    %1571 = vmatmul.mubr.bf16.gmra.mrb[0].mxu0 %v1456
    %v1572 = vpop.f32.mrb[0].mxu0
    %v1573 = vadd.f32 %v1227, %v1572
    %v1574 = vpop.f32.mrb[0].mxu0
    %v1575 = vpop.f32.mrb[0].mxu0
    %v1576 = vadd.f32 %v1232, %v1575
    %v1577 = vpop.f32.mrb[0].mxu0
    %1578 = vmatprep.mubr.bf16.mxu0 %v1459
    %1579 = vmatmul.mubr.bf16.gmra.mrb[0].mxu0 %v1458
    %v1580 = vpop.f32.mrb[0].mxu0
    %v1581 = vadd.f32 %v1237, %v1580
    %v1582 = vpop.f32.mrb[0].mxu0
    %v1583 = vpop.f32.mrb[0].mxu0
    %v1584 = vadd.f32 %v1242, %v1583
    %v1585 = vpop.f32.mrb[0].mxu0
    %1586 = vmatprep.mubr.bf16.mxu0 %v1461
    %1587 = vmatmul.mubr.bf16.gmra.mrb[0].mxu0 %v1460
    %v1588 = vpop.f32.mrb[0].mxu0
    %v1589 = vadd.f32 %v1247, %v1588
    %v1590 = vpop.f32.mrb[0].mxu0
    %v1591 = vpop.f32.mrb[0].mxu0
    %v1592 = vadd.f32 %v1252, %v1591
    %v1593 = vpop.f32.mrb[0].mxu0
    %1594 = vmatprep.mubr.bf16.mxu0 %v1463
    %1595 = vmatmul.mubr.bf16.gmra.mrb[0].mxu0 %v1462
    %v1596 = vpop.f32.mrb[0].mxu0
    %v1597 = vadd.f32 %v1257, %v1596
    %v1598 = vpop.f32.mrb[0].mxu0
    %v1599 = vpop.f32.mrb[0].mxu0
    %v1600 = vadd.f32 %v1262, %v1599
    %v1601 = vpop.f32.mrb[0].mxu0
    %1602 = vmatprep.mubr.bf16.mxu0 %v1465
    %1603 = vmatmul.mubr.bf16.gmra.mrb[0].mxu0 %v1464
    %v1604 = vpop.f32.mrb[0].mxu0
    %v1605 = vadd.f32 %v1267, %v1604
    %v1606 = vpop.f32.mrb[0].mxu0
    %v1607 = vpop.f32.mrb[0].mxu0
    %v1608 = vadd.f32 %v1272, %v1607
    %v1609 = vpop.f32.mrb[0].mxu0
    %1610 = vmatprep.mubr.bf16.mxu0 %v1467
    %1611 = vmatmul.mubr.bf16.gmra.mrb[0].mxu0 %v1466
    %v1612 = vpop.f32.mrb[0].mxu0
    %v1613 = vadd.f32 %v1277, %v1612
    %v1614 = vpop.f32.mrb[0].mxu0
    %v1615 = vpop.f32.mrb[0].mxu0
    %v1616 = vadd.f32 %v1282, %v1615
    %v1617 = vpop.f32.mrb[0].mxu0
    %1618 = vmatprep.mubr.bf16.mxu0 %v1469
    %1619 = vmatmul.mubr.bf16.gmra.mrb[0].mxu0 %v1468
    %v1620 = vpop.f32.mrb[0].mxu0
    %v1621 = vadd.f32 %v1287, %v1620
    %v1622 = vpop.f32.mrb[0].mxu0
    %v1623 = vpop.f32.mrb[0].mxu0
    %v1624 = vadd.f32 %v1292, %v1623
    %v1625 = vpop.f32.mrb[0].mxu0
    %1626 = vmatprep.mubr.bf16.mxu0 %v1471
    %1627 = vmatmul.mubr.bf16.gmra.mrb[0].mxu0 %v1470
    %v1628 = vpop.f32.mrb[0].mxu0
    %v1629 = vadd.f32 %v1297, %v1628
    %v1630 = vpop.f32.mrb[0].mxu0
    %v1631 = vpop.f32.mrb[0].mxu0
    %v1632 = vadd.f32 %v1302, %v1631
    %v1633 = vpop.f32.mrb[0].mxu0
    %1634 = vmatprep.mubr.bf16.mxu0 %v1473
    %1635 = vmatmul.mubr.bf16.gmra.mrb[0].mxu0 %v1472
    %v1636 = vpop.f32.mrb[0].mxu0
    %v1637 = vadd.f32 %v1307, %v1636
    %v1638 = vpop.f32.mrb[0].mxu0
    %v1639 = vpop.f32.mrb[0].mxu0
    %v1640 = vadd.f32 %v1312, %v1639
    %v1641 = vpop.f32.mrb[0].mxu0
    %1642 = vmatprep.mubr.bf16.mxu0 %v1475
    %1643 = vmatmul.mubr.bf16.gmra.mrb[0].mxu0 %v1474
    %v1644 = vpop.f32.mrb[0].mxu0
    %v1645 = vadd.f32 %v1317, %v1644
    %v1646 = vpop.f32.mrb[0].mxu0
    %v1647 = vpop.f32.mrb[0].mxu0
    %v1648 = vadd.f32 %v1322, %v1647
    %v1649 = vpop.f32.mrb[0].mxu0
    %1650 = vmatprep.mubr.bf16.mxu0 %v1477
    %1651 = vmatmul.mubr.bf16.gmra.mrb[0].mxu0 %v1476
    %v1652 = vpop.f32.mrb[0].mxu0
    %v1653 = vadd.f32 %v1327, %v1652
    %v1654 = vpop.f32.mrb[0].mxu0
    %v1655 = vpop.f32.mrb[0].mxu0
    %v1656 = vadd.f32 %v1332, %v1655
    %v1657 = vpop.f32.mrb[0].mxu0
    %1658 = vmatprep.mubr.bf16.mxu0 %v1479
    %1659 = vmatmul.mubr.bf16.gmra.mrb[0].mxu0 %v1478
    %v1660 = vpop.f32.mrb[0].mxu0
    %v1661 = vadd.f32 %v1337, %v1660
    %v1662 = vpop.f32.mrb[0].mxu0
    %v1663 = vpop.f32.mrb[0].mxu0
    %v1664 = vadd.f32 %v1342, %v1663
    %v1665 = vpop.f32.mrb[0].mxu0
    %1666 = vmatprep.mubr.bf16.mxu0 %v1481
    %1667 = vmatmul.mubr.bf16.gmra.mrb[0].mxu0 %v1480
    %v1668 = vpop.f32.mrb[0].mxu0
    %v1669 = vadd.f32 %v1347, %v1668
    %v1670 = vpop.f32.mrb[0].mxu0
    %v1671 = vpop.f32.mrb[0].mxu0
    %v1672 = vadd.f32 %v1352, %v1671
    %v1673 = vpop.f32.mrb[0].mxu0
    %1674 = vdwg.mxu0
    %v1675 = vmax.f32 %v1549, 0.0
    %v1676 = vmax.f32 %v1552, 0.0
    %v1677 = vmax.f32 %v1557, 0.0
    %v1678 = vmax.f32 %v1560, 0.0
    %v1679 = vmax.f32 %v1565, 0.0
    %v1680 = vmax.f32 %v1568, 0.0
    %v1681 = vmax.f32 %v1573, 0.0
    %v1682 = vmax.f32 %v1576, 0.0
    %v1683 = vmax.f32 %v1581, 0.0
    %v1684 = vmax.f32 %v1584, 0.0
    %v1685 = vmax.f32 %v1589, 0.0
    %v1686 = vmax.f32 %v1592, 0.0
    %v1687 = vmax.f32 %v1597, 0.0
    %v1688 = vmax.f32 %v1600, 0.0
    %v1689 = vmax.f32 %v1605, 0.0
    %v1690 = vmax.f32 %v1608, 0.0
    %v1691 = vmax.f32 %v1613, 0.0
    %v1692 = vmax.f32 %v1616, 0.0
    %v1693 = vmax.f32 %v1621, 0.0
    %v1694 = vmax.f32 %v1624, 0.0
    %v1695 = vmax.f32 %v1629, 0.0
    %v1696 = vmax.f32 %v1632, 0.0
    %v1697 = vmax.f32 %v1637, 0.0
    %v1698 = vmax.f32 %v1640, 0.0
    %v1699 = vmax.f32 %v1645, 0.0
    %v1700 = vmax.f32 %v1648, 0.0
    %v1701 = vmax.f32 %v1653, 0.0
    %v1702 = vmax.f32 %v1656, 0.0
    %v1703 = vmax.f32 %v1661, 0.0
    %v1704 = vmax.f32 %v1664, 0.0
    %v1705 = vmax.f32 %v1669, 0.0
    %v1706 = vmax.f32 %v1672, 0.0
    %v1707 = vld [vmem:[%s5] sm:$0xff]
    %v1708 = vld [vmem:[%s5 + $0x8] sm:$0xff]
    %v1709 = vld [vmem:[%s5 + $0x10] sm:$0xff]
    %v1710 = vld [vmem:[%s5 + $0x18] sm:$0xff]
    %v1711 = vld [vmem:[%s5 + $0x20] sm:$0xff]
    %v1712 = vld [vmem:[%s5 + $0x28] sm:$0xff]
    %v1713 = vld [vmem:[%s5 + $0x30] sm:$0xff]
    %v1714 = vld [vmem:[%s5 + $0x38] sm:$0xff]
    %v1715 = vld [vmem:[%s5 + $0x40] sm:$0xff]
    %v1716 = vld [vmem:[%s5 + $0x48] sm:$0xff]
    %v1717 = vld [vmem:[%s5 + $0x50] sm:$0xff]
    %v1718 = vld [vmem:[%s5 + $0x58] sm:$0xff]
    %v1719 = vld [vmem:[%s5 + $0x60] sm:$0xff]
    %v1720 = vld [vmem:[%s5 + $0x68] sm:$0xff]
    %v1721 = vld [vmem:[%s5 + $0x70] sm:$0xff]
    %v1722 = vld [vmem:[%s5 + $0x78] sm:$0xff]
    %v1723 = vld [vmem:[%s5 + $0x80] sm:$0xff]
    %v1724 = vld [vmem:[%s5 + $0x88] sm:$0xff]
    %v1725 = vld [vmem:[%s5 + $0x90] sm:$0xff]
    %v1726 = vld [vmem:[%s5 + $0x98] sm:$0xff]
    %v1727 = vld [vmem:[%s5 + $0xa0] sm:$0xff]
    %v1728 = vld [vmem:[%s5 + $0xa8] sm:$0xff]
    %v1729 = vld [vmem:[%s5 + $0xb0] sm:$0xff]
    %v1730 = vld [vmem:[%s5 + $0xb8] sm:$0xff]
    %v1731 = vld [vmem:[%s5 + $0xc0] sm:$0xff]
    %v1732 = vld [vmem:[%s5 + $0xc8] sm:$0xff]
    %v1733 = vld [vmem:[%s5 + $0xd0] sm:$0xff]
    %v1734 = vld [vmem:[%s5 + $0xd8] sm:$0xff]
    %v1735 = vld [vmem:[%s5 + $0xe0] sm:$0xff]
    %v1736 = vld [vmem:[%s5 + $0xe8] sm:$0xff]
    %v1737 = vld [vmem:[%s5 + $0xf0] sm:$0xff]
    %v1738 = vld [vmem:[%s5 + $0xf8] sm:$0xff]
    %v1739 = vld [vmem:[%s6] sm:$0xff]
    %v1740 = vld [vmem:[%s6 + $0x8] sm:$0xff]
    %v1741 = vld [vmem:[%s6 + $0x10] sm:$0xff]
    %v1742 = vld [vmem:[%s6 + $0x18] sm:$0xff]
    %v1743 = vld [vmem:[%s6 + $0x20] sm:$0xff]
    %v1744 = vld [vmem:[%s6 + $0x28] sm:$0xff]
    %v1745 = vld [vmem:[%s6 + $0x30] sm:$0xff]
    %v1746 = vld [vmem:[%s6 + $0x38] sm:$0xff]
    %v1747 = vld [vmem:[%s6 + $0x40] sm:$0xff]
    %v1748 = vld [vmem:[%s6 + $0x48] sm:$0xff]
    %v1749 = vld [vmem:[%s6 + $0x50] sm:$0xff]
    %v1750 = vld [vmem:[%s6 + $0x58] sm:$0xff]
    %v1751 = vld [vmem:[%s6 + $0x60] sm:$0xff]
    %v1752 = vld [vmem:[%s6 + $0x68] sm:$0xff]
    %v1753 = vld [vmem:[%s6 + $0x70] sm:$0xff]
    %v1754 = vld [vmem:[%s6 + $0x78] sm:$0xff]
    %v1755 = vld [vmem:[%s6 + $0x80] sm:$0xff]
    %v1756 = vld [vmem:[%s6 + $0x88] sm:$0xff]
    %v1757 = vld [vmem:[%s6 + $0x90] sm:$0xff]
    %v1758 = vld [vmem:[%s6 + $0x98] sm:$0xff]
    %v1759 = vld [vmem:[%s6 + $0xa0] sm:$0xff]
    %v1760 = vld [vmem:[%s6 + $0xa8] sm:$0xff]
    %v1761 = vld [vmem:[%s6 + $0xb0] sm:$0xff]
    %v1762 = vld [vmem:[%s6 + $0xb8] sm:$0xff]
    %v1763 = vld [vmem:[%s6 + $0xc0] sm:$0xff]
    %v1764 = vld [vmem:[%s6 + $0xc8] sm:$0xff]
    %v1765 = vld [vmem:[%s6 + $0xd0] sm:$0xff]
    %v1766 = vld [vmem:[%s6 + $0xd8] sm:$0xff]
    %v1767 = vld [vmem:[%s6 + $0xe0] sm:$0xff]
    %v1768 = vld [vmem:[%s6 + $0xe8] sm:$0xff]
    %v1769 = vld [vmem:[%s6 + $0xf0] sm:$0xff]
    %v1770 = vld [vmem:[%s6 + $0xf8] sm:$0xff]
    %1772 = vset.pattern.permute.xlu0 0
    %1773 = vperm.xlu0 %1772, %v1739
    %v1774 = vpop.permute.xlu0 %1773
    %1777 = vset.pattern.permute.xlu0 0
    %1778 = vperm.xlu0 %1777, %v1740
    %v1779 = vpop.permute.xlu0 %1778
    %1782 = vset.pattern.permute.xlu0 0
    %1783 = vperm.xlu0 %1782, %v1741
    %v1784 = vpop.permute.xlu0 %1783
    %1787 = vset.pattern.permute.xlu0 0
    %1788 = vperm.xlu0 %1787, %v1742
    %v1789 = vpop.permute.xlu0 %1788
    %1792 = vset.pattern.permute.xlu0 0
    %1793 = vperm.xlu0 %1792, %v1743
    %v1794 = vpop.permute.xlu0 %1793
    %1797 = vset.pattern.permute.xlu0 0
    %1798 = vperm.xlu0 %1797, %v1744
    %v1799 = vpop.permute.xlu0 %1798
    %1802 = vset.pattern.permute.xlu0 0
    %1803 = vperm.xlu0 %1802, %v1745
    %v1804 = vpop.permute.xlu0 %1803
    %1807 = vset.pattern.permute.xlu0 0
    %1808 = vperm.xlu0 %1807, %v1746
    %v1809 = vpop.permute.xlu0 %1808
    %1812 = vset.pattern.permute.xlu0 0
    %1813 = vperm.xlu0 %1812, %v1747
    %v1814 = vpop.permute.xlu0 %1813
    %1817 = vset.pattern.permute.xlu0 0
    %1818 = vperm.xlu0 %1817, %v1748
    %v1819 = vpop.permute.xlu0 %1818
    %1822 = vset.pattern.permute.xlu0 0
    %1823 = vperm.xlu0 %1822, %v1749
    %v1824 = vpop.permute.xlu0 %1823
    %1827 = vset.pattern.permute.xlu0 0
    %1828 = vperm.xlu0 %1827, %v1750
    %v1829 = vpop.permute.xlu0 %1828
    %1832 = vset.pattern.permute.xlu0 0
    %1833 = vperm.xlu0 %1832, %v1751
    %v1834 = vpop.permute.xlu0 %1833
    %1837 = vset.pattern.permute.xlu0 0
    %1838 = vperm.xlu0 %1837, %v1752
    %v1839 = vpop.permute.xlu0 %1838
    %1842 = vset.pattern.permute.xlu0 0
    %1843 = vperm.xlu0 %1842, %v1753
    %v1844 = vpop.permute.xlu0 %1843
    %1847 = vset.pattern.permute.xlu0 0
    %1848 = vperm.xlu0 %1847, %v1754
    %v1849 = vpop.permute.xlu0 %1848
    %1852 = vset.pattern.permute.xlu0 0
    %1853 = vperm.xlu0 %1852, %v1755
    %v1854 = vpop.permute.xlu0 %1853
    %1857 = vset.pattern.permute.xlu0 0
    %1858 = vperm.xlu0 %1857, %v1756
    %v1859 = vpop.permute.xlu0 %1858
    %1862 = vset.pattern.permute.xlu0 0
    %1863 = vperm.xlu0 %1862, %v1757
    %v1864 = vpop.permute.xlu0 %1863
    %1867 = vset.pattern.permute.xlu0 0
    %1868 = vperm.xlu0 %1867, %v1758
    %v1869 = vpop.permute.xlu0 %1868
    %1872 = vset.pattern.permute.xlu0 0
    %1873 = vperm.xlu0 %1872, %v1759
    %v1874 = vpop.permute.xlu0 %1873
    %1877 = vset.pattern.permute.xlu0 0
    %1878 = vperm.xlu0 %1877, %v1760
    %v1879 = vpop.permute.xlu0 %1878
    %1882 = vset.pattern.permute.xlu0 0
    %1883 = vperm.xlu0 %1882, %v1761
    %v1884 = vpop.permute.xlu0 %1883
    %1887 = vset.pattern.permute.xlu0 0
    %1888 = vperm.xlu0 %1887, %v1762
    %v1889 = vpop.permute.xlu0 %1888
    %1892 = vset.pattern.permute.xlu0 0
    %1893 = vperm.xlu0 %1892, %v1763
    %v1894 = vpop.permute.xlu0 %1893
    %1897 = vset.pattern.permute.xlu0 0
    %1898 = vperm.xlu0 %1897, %v1764
    %v1899 = vpop.permute.xlu0 %1898
    %1902 = vset.pattern.permute.xlu0 0
    %1903 = vperm.xlu0 %1902, %v1765
    %v1904 = vpop.permute.xlu0 %1903
    %1907 = vset.pattern.permute.xlu0 0
    %1908 = vperm.xlu0 %1907, %v1766
    %v1909 = vpop.permute.xlu0 %1908
    %1912 = vset.pattern.permute.xlu0 0
    %1913 = vperm.xlu0 %1912, %v1767
    %v1914 = vpop.permute.xlu0 %1913
    %1917 = vset.pattern.permute.xlu0 0
    %1918 = vperm.xlu0 %1917, %v1768
    %v1919 = vpop.permute.xlu0 %1918
    %1922 = vset.pattern.permute.xlu0 0
    %1923 = vperm.xlu0 %1922, %v1769
    %v1924 = vpop.permute.xlu0 %1923
    %1927 = vset.pattern.permute.xlu0 0
    %1928 = vperm.xlu0 %1927, %v1770
    %v1929 = vpop.permute.xlu0 %1928
    %v1963 = vunpack.c.l.b16 %v1707
    %v1964 = vunpack.c.h.b16 %v1707
    %v1965 = vunpack.c.l.b16 %v1708
    %v1966 = vunpack.c.h.b16 %v1708
    %v1967 = vunpack.c.l.b16 %v1709
    %v1968 = vunpack.c.h.b16 %v1709
    %v1969 = vunpack.c.l.b16 %v1710
    %v1970 = vunpack.c.h.b16 %v1710
    %v1971 = vunpack.c.l.b16 %v1711
    %v1972 = vunpack.c.h.b16 %v1711
    %v1973 = vunpack.c.l.b16 %v1712
    %v1974 = vunpack.c.h.b16 %v1712
    %v1975 = vunpack.c.l.b16 %v1713
    %v1976 = vunpack.c.h.b16 %v1713
    %v1977 = vunpack.c.l.b16 %v1714
    %v1978 = vunpack.c.h.b16 %v1714
    %v1979 = vunpack.c.l.b16 %v1715
    %v1980 = vunpack.c.h.b16 %v1715
    %v1981 = vunpack.c.l.b16 %v1716
    %v1982 = vunpack.c.h.b16 %v1716
    %v1983 = vunpack.c.l.b16 %v1717
    %v1984 = vunpack.c.h.b16 %v1717
    %v1985 = vunpack.c.l.b16 %v1718
    %v1986 = vunpack.c.h.b16 %v1718
    %v1987 = vunpack.c.l.b16 %v1719
    %v1988 = vunpack.c.h.b16 %v1719
    %v1989 = vunpack.c.l.b16 %v1720
    %v1990 = vunpack.c.h.b16 %v1720
    %v1991 = vunpack.c.l.b16 %v1721
    %v1992 = vunpack.c.h.b16 %v1721
    %v1993 = vunpack.c.l.b16 %v1722
    %v1994 = vunpack.c.h.b16 %v1722
    %v1995 = vunpack.c.l.b16 %v1723
    %v1996 = vunpack.c.h.b16 %v1723
    %v1997 = vunpack.c.l.b16 %v1724
    %v1998 = vunpack.c.h.b16 %v1724
    %v1999 = vunpack.c.l.b16 %v1725
    %v2000 = vunpack.c.h.b16 %v1725
    %v2001 = vunpack.c.l.b16 %v1726
    %v2002 = vunpack.c.h.b16 %v1726
    %v2003 = vunpack.c.l.b16 %v1727
    %v2004 = vunpack.c.h.b16 %v1727
    %v2005 = vunpack.c.l.b16 %v1728
    %v2006 = vunpack.c.h.b16 %v1728
    %v2007 = vunpack.c.l.b16 %v1729
    %v2008 = vunpack.c.h.b16 %v1729
    %v2009 = vunpack.c.l.b16 %v1730
    %v2010 = vunpack.c.h.b16 %v1730
    %v2011 = vunpack.c.l.b16 %v1731
    %v2012 = vunpack.c.h.b16 %v1731
    %v2013 = vunpack.c.l.b16 %v1732
    %v2014 = vunpack.c.h.b16 %v1732
    %v2015 = vunpack.c.l.b16 %v1733
    %v2016 = vunpack.c.h.b16 %v1733
    %v2017 = vunpack.c.l.b16 %v1734
    %v2018 = vunpack.c.h.b16 %v1734
    %v2019 = vunpack.c.l.b16 %v1735
    %v2020 = vunpack.c.h.b16 %v1735
    %v2021 = vunpack.c.l.b16 %v1736
    %v2022 = vunpack.c.h.b16 %v1736
    %v2023 = vunpack.c.l.b16 %v1737
    %v2024 = vunpack.c.h.b16 %v1737
    %v2025 = vunpack.c.l.b16 %v1738
    %v2026 = vunpack.c.h.b16 %v1738
    %v2027 = vpack.c.b16 %v1965, %v1963
    %v2028 = vpack.c.b16 %v1966, %v1964
    %v2029 = vpack.c.b16 %v1969, %v1967
    %v2030 = vpack.c.b16 %v1970, %v1968
    %v2031 = vpack.c.b16 %v1973, %v1971
    %v2032 = vpack.c.b16 %v1974, %v1972
    %v2033 = vpack.c.b16 %v1977, %v1975
    %v2034 = vpack.c.b16 %v1978, %v1976
    %v2035 = vpack.c.b16 %v1981, %v1979
    %v2036 = vpack.c.b16 %v1982, %v1980
    %v2037 = vpack.c.b16 %v1985, %v1983
    %v2038 = vpack.c.b16 %v1986, %v1984
    %v2039 = vpack.c.b16 %v1989, %v1987
    %v2040 = vpack.c.b16 %v1990, %v1988
    %v2041 = vpack.c.b16 %v1993, %v1991
    %v2042 = vpack.c.b16 %v1994, %v1992
    %v2043 = vpack.c.b16 %v1997, %v1995
    %v2044 = vpack.c.b16 %v1998, %v1996
    %v2045 = vpack.c.b16 %v2001, %v1999
    %v2046 = vpack.c.b16 %v2002, %v2000
    %v2047 = vpack.c.b16 %v2005, %v2003
    %v2048 = vpack.c.b16 %v2006, %v2004
    %v2049 = vpack.c.b16 %v2009, %v2007
    %v2050 = vpack.c.b16 %v2010, %v2008
    %v2051 = vpack.c.b16 %v2013, %v2011
    %v2052 = vpack.c.b16 %v2014, %v2012
    %v2053 = vpack.c.b16 %v2017, %v2015
    %v2054 = vpack.c.b16 %v2018, %v2016
    %v2055 = vpack.c.b16 %v2021, %v2019
    %v2056 = vpack.c.b16 %v2022, %v2020
    %v2057 = vpack.c.b16 %v2025, %v2023
    %v2058 = vpack.c.b16 %v2026, %v2024
    %2091 = vmatprep.subr.bf16.mxu0 0
    %2092 = vmatpush1.bf16.msra.mxu0 %v1114
    %2093 = vmatprep.subr.bf16.mxu0 0
    %2094 = vmatpush1.bf16.msra.mxu0 %v1115
    %2095 = vmatprep.subr.bf16.mxu0 0
    %2096 = vmatpush1.bf16.msra.mxu0 %v1116
    %2097 = vmatprep.subr.bf16.mxu0 0
    %2098 = vmatpush1.bf16.msra.mxu0 %v1117
    %2099 = vmatprep.subr.bf16.mxu0 0
    %2100 = vmatpush1.bf16.msra.mxu0 %v1118
    %2101 = vmatprep.subr.bf16.mxu0 0
    %2102 = vmatpush1.bf16.msra.mxu0 %v1119
    %2103 = vmatprep.subr.bf16.mxu0 0
    %2104 = vmatpush1.bf16.msra.mxu0 %v1120
    %2105 = vmatprep.subr.bf16.mxu0 0
    %2106 = vmatpush1.bf16.msra.mxu0 %v1121
    %2107 = vmatprep.subr.bf16.mxu0 0
    %2108 = vmatpush1.bf16.msra.mxu0 %v1122
    %2109 = vmatprep.subr.bf16.mxu0 0
    %2110 = vmatpush1.bf16.msra.mxu0 %v1123
    %2111 = vmatprep.subr.bf16.mxu0 0
    %2112 = vmatpush1.bf16.msra.mxu0 %v1124
    %2113 = vmatprep.subr.bf16.mxu0 0
    %2114 = vmatpush1.bf16.msra.mxu0 %v1125
    %2115 = vmatprep.subr.bf16.mxu0 0
    %2116 = vmatpush1.bf16.msra.mxu0 %v1126
    %2117 = vmatprep.subr.bf16.mxu0 0
    %2118 = vmatpush1.bf16.msra.mxu0 %v1127
    %2119 = vmatprep.subr.bf16.mxu0 0
    %2120 = vmatpush1.bf16.msra.mxu0 %v1128
    %2121 = vmatprep.subr.bf16.mxu0 0
    %2122 = vmatpush1.bf16.msra.mxu0 %v1129
    %2123 = vmatprep.mubr.bf16.mxu0 %v2028
    %2124 = vmatmul.mubr.bf16.gmra.mrb[0].mxu0 %v2027
    %v2125 = vpop.f32.mrb[0].mxu0
    %v2126 = vadd.f32 %v1774, %v2125
    %v2127 = vpop.f32.mrb[0].mxu0
    %v2128 = vpop.f32.mrb[0].mxu0
    %v2129 = vadd.f32 %v1779, %v2128
    %v2130 = vpop.f32.mrb[0].mxu0
    %2131 = vmatprep.mubr.bf16.mxu0 %v2030
    %2132 = vmatmul.mubr.bf16.gmra.mrb[0].mxu0 %v2029
    %v2133 = vpop.f32.mrb[0].mxu0
    %v2134 = vadd.f32 %v1784, %v2133
    %v2135 = vpop.f32.mrb[0].mxu0
    %v2136 = vpop.f32.mrb[0].mxu0
    %v2137 = vadd.f32 %v1789, %v2136
    %v2138 = vpop.f32.mrb[0].mxu0
    %2139 = vmatprep.mubr.bf16.mxu0 %v2032
    %2140 = vmatmul.mubr.bf16.gmra.mrb[0].mxu0 %v2031
    %v2141 = vpop.f32.mrb[0].mxu0
    %v2142 = vadd.f32 %v1794, %v2141
    %v2143 = vpop.f32.mrb[0].mxu0
    %v2144 = vpop.f32.mrb[0].mxu0
    %v2145 = vadd.f32 %v1799, %v2144
    %v2146 = vpop.f32.mrb[0].mxu0
    %2147 = vmatprep.mubr.bf16.mxu0 %v2034
    %2148 = vmatmul.mubr.bf16.gmra.mrb[0].mxu0 %v2033
    %v2149 = vpop.f32.mrb[0].mxu0
    %v2150 = vadd.f32 %v1804, %v2149
    %v2151 = vpop.f32.mrb[0].mxu0
    %v2152 = vpop.f32.mrb[0].mxu0
    %v2153 = vadd.f32 %v1809, %v2152
    %v2154 = vpop.f32.mrb[0].mxu0
    %2155 = vmatprep.mubr.bf16.mxu0 %v2036
    %2156 = vmatmul.mubr.bf16.gmra.mrb[0].mxu0 %v2035
    %v2157 = vpop.f32.mrb[0].mxu0
    %v2158 = vadd.f32 %v1814, %v2157
    %v2159 = vpop.f32.mrb[0].mxu0
    %v2160 = vpop.f32.mrb[0].mxu0
    %v2161 = vadd.f32 %v1819, %v2160
    %v2162 = vpop.f32.mrb[0].mxu0
    %2163 = vmatprep.mubr.bf16.mxu0 %v2038
    %2164 = vmatmul.mubr.bf16.gmra.mrb[0].mxu0 %v2037
    %v2165 = vpop.f32.mrb[0].mxu0
    %v2166 = vadd.f32 %v1824, %v2165
    %v2167 = vpop.f32.mrb[0].mxu0
    %v2168 = vpop.f32.mrb[0].mxu0
    %v2169 = vadd.f32 %v1829, %v2168
    %v2170 = vpop.f32.mrb[0].mxu0
    %2171 = vmatprep.mubr.bf16.mxu0 %v2040
    %2172 = vmatmul.mubr.bf16.gmra.mrb[0].mxu0 %v2039
    %v2173 = vpop.f32.mrb[0].mxu0
    %v2174 = vadd.f32 %v1834, %v2173
    %v2175 = vpop.f32.mrb[0].mxu0
    %v2176 = vpop.f32.mrb[0].mxu0
    %v2177 = vadd.f32 %v1839, %v2176
    %v2178 = vpop.f32.mrb[0].mxu0
    %2179 = vmatprep.mubr.bf16.mxu0 %v2042
    %2180 = vmatmul.mubr.bf16.gmra.mrb[0].mxu0 %v2041
    %v2181 = vpop.f32.mrb[0].mxu0
    %v2182 = vadd.f32 %v1844, %v2181
    %v2183 = vpop.f32.mrb[0].mxu0
    %v2184 = vpop.f32.mrb[0].mxu0
    %v2185 = vadd.f32 %v1849, %v2184
    %v2186 = vpop.f32.mrb[0].mxu0
    %2187 = vmatprep.mubr.bf16.mxu0 %v2044
    %2188 = vmatmul.mubr.bf16.gmra.mrb[0].mxu0 %v2043
    %v2189 = vpop.f32.mrb[0].mxu0
    %v2190 = vadd.f32 %v1854, %v2189
    %v2191 = vpop.f32.mrb[0].mxu0
    %v2192 = vpop.f32.mrb[0].mxu0
    %v2193 = vadd.f32 %v1859, %v2192
    %v2194 = vpop.f32.mrb[0].mxu0
    %2195 = vmatprep.mubr.bf16.mxu0 %v2046
    %2196 = vmatmul.mubr.bf16.gmra.mrb[0].mxu0 %v2045
    %v2197 = vpop.f32.mrb[0].mxu0
    %v2198 = vadd.f32 %v1864, %v2197
    %v2199 = vpop.f32.mrb[0].mxu0
    %v2200 = vpop.f32.mrb[0].mxu0
    %v2201 = vadd.f32 %v1869, %v2200
    %v2202 = vpop.f32.mrb[0].mxu0
    %2203 = vmatprep.mubr.bf16.mxu0 %v2048
    %2204 = vmatmul.mubr.bf16.gmra.mrb[0].mxu0 %v2047
    %v2205 = vpop.f32.mrb[0].mxu0
    %v2206 = vadd.f32 %v1874, %v2205
    %v2207 = vpop.f32.mrb[0].mxu0
    %v2208 = vpop.f32.mrb[0].mxu0
    %v2209 = vadd.f32 %v1879, %v2208
    %v2210 = vpop.f32.mrb[0].mxu0
    %2211 = vmatprep.mubr.bf16.mxu0 %v2050
    %2212 = vmatmul.mubr.bf16.gmra.mrb[0].mxu0 %v2049
    %v2213 = vpop.f32.mrb[0].mxu0
    %v2214 = vadd.f32 %v1884, %v2213
    %v2215 = vpop.f32.mrb[0].mxu0
    %v2216 = vpop.f32.mrb[0].mxu0
    %v2217 = vadd.f32 %v1889, %v2216
    %v2218 = vpop.f32.mrb[0].mxu0
    %2219 = vmatprep.mubr.bf16.mxu0 %v2052
    %2220 = vmatmul.mubr.bf16.gmra.mrb[0].mxu0 %v2051
    %v2221 = vpop.f32.mrb[0].mxu0
    %v2222 = vadd.f32 %v1894, %v2221
    %v2223 = vpop.f32.mrb[0].mxu0
    %v2224 = vpop.f32.mrb[0].mxu0
    %v2225 = vadd.f32 %v1899, %v2224
    %v2226 = vpop.f32.mrb[0].mxu0
    %2227 = vmatprep.mubr.bf16.mxu0 %v2054
    %2228 = vmatmul.mubr.bf16.gmra.mrb[0].mxu0 %v2053
    %v2229 = vpop.f32.mrb[0].mxu0
    %v2230 = vadd.f32 %v1904, %v2229
    %v2231 = vpop.f32.mrb[0].mxu0
    %v2232 = vpop.f32.mrb[0].mxu0
    %v2233 = vadd.f32 %v1909, %v2232
    %v2234 = vpop.f32.mrb[0].mxu0
    %2235 = vmatprep.mubr.bf16.mxu0 %v2056
    %2236 = vmatmul.mubr.bf16.gmra.mrb[0].mxu0 %v2055
    %v2237 = vpop.f32.mrb[0].mxu0
    %v2238 = vadd.f32 %v1914, %v2237
    %v2239 = vpop.f32.mrb[0].mxu0
    %v2240 = vpop.f32.mrb[0].mxu0
    %v2241 = vadd.f32 %v1919, %v2240
    %v2242 = vpop.f32.mrb[0].mxu0
    %2243 = vmatprep.mubr.bf16.mxu0 %v2058
    %2244 = vmatmul.mubr.bf16.gmra.mrb[0].mxu0 %v2057
    %v2245 = vpop.f32.mrb[0].mxu0
    %v2246 = vadd.f32 %v1924, %v2245
    %v2247 = vpop.f32.mrb[0].mxu0
    %v2248 = vpop.f32.mrb[0].mxu0
    %v2249 = vadd.f32 %v1929, %v2248
    %v2250 = vpop.f32.mrb[0].mxu0
    %2251 = vdwg.mxu0
    %v2252 = vmax.f32 %v2126, 0.0
    %v2253 = vmax.f32 %v2129, 0.0
    %v2254 = vmax.f32 %v2134, 0.0
    %v2255 = vmax.f32 %v2137, 0.0
    %v2256 = vmax.f32 %v2142, 0.0
    %v2257 = vmax.f32 %v2145, 0.0
    %v2258 = vmax.f32 %v2150, 0.0
    %v2259 = vmax.f32 %v2153, 0.0
    %v2260 = vmax.f32 %v2158, 0.0
    %v2261 = vmax.f32 %v2161, 0.0
    %v2262 = vmax.f32 %v2166, 0.0
    %v2263 = vmax.f32 %v2169, 0.0
    %v2264 = vmax.f32 %v2174, 0.0
    %v2265 = vmax.f32 %v2177, 0.0
    %v2266 = vmax.f32 %v2182, 0.0
    %v2267 = vmax.f32 %v2185, 0.0
    %v2268 = vmax.f32 %v2190, 0.0
    %v2269 = vmax.f32 %v2193, 0.0
    %v2270 = vmax.f32 %v2198, 0.0
    %v2271 = vmax.f32 %v2201, 0.0
    %v2272 = vmax.f32 %v2206, 0.0
    %v2273 = vmax.f32 %v2209, 0.0
    %v2274 = vmax.f32 %v2214, 0.0
    %v2275 = vmax.f32 %v2217, 0.0
    %v2276 = vmax.f32 %v2222, 0.0
    %v2277 = vmax.f32 %v2225, 0.0
    %v2278 = vmax.f32 %v2230, 0.0
    %v2279 = vmax.f32 %v2233, 0.0
    %v2280 = vmax.f32 %v2238, 0.0
    %v2281 = vmax.f32 %v2241, 0.0
    %v2282 = vmax.f32 %v2246, 0.0
    %v2283 = vmax.f32 %v2249, 0.0
    %v2284 = vld [vmem:[%s7] sm:$0x3]
    %v2285 = vpack.c.bf16 %v1676, %v1675
    %v2286 = vpack.c.bf16 %v1678, %v1677
    %v2287 = vpack.c.bf16 %v1680, %v1679
    %v2288 = vpack.c.bf16 %v1682, %v1681
    %v2289 = vpack.c.bf16 %v1684, %v1683
    %v2290 = vpack.c.bf16 %v1686, %v1685
    %v2291 = vpack.c.bf16 %v1688, %v1687
    %v2292 = vpack.c.bf16 %v1690, %v1689
    %v2293 = vpack.c.bf16 %v1692, %v1691
    %v2294 = vpack.c.bf16 %v1694, %v1693
    %v2295 = vpack.c.bf16 %v1696, %v1695
    %v2296 = vpack.c.bf16 %v1698, %v1697
    %v2297 = vpack.c.bf16 %v1700, %v1699
    %v2298 = vpack.c.bf16 %v1702, %v1701
    %v2299 = vpack.c.bf16 %v1704, %v1703
    %v2300 = vpack.c.bf16 %v1706, %v1705
    %v2301 = vld [vmem:[%s8] sm:$0x3]
    %v2302 = vpack.c.bf16 %v2253, %v2252
    %v2303 = vpack.c.bf16 %v2255, %v2254
    %v2304 = vpack.c.bf16 %v2257, %v2256
    %v2305 = vpack.c.bf16 %v2259, %v2258
    %v2306 = vpack.c.bf16 %v2261, %v2260
    %v2307 = vpack.c.bf16 %v2263, %v2262
    %v2308 = vpack.c.bf16 %v2265, %v2264
    %v2309 = vpack.c.bf16 %v2267, %v2266
    %v2310 = vpack.c.bf16 %v2269, %v2268
    %v2311 = vpack.c.bf16 %v2271, %v2270
    %v2312 = vpack.c.bf16 %v2273, %v2272
    %v2313 = vpack.c.bf16 %v2275, %v2274
    %v2314 = vpack.c.bf16 %v2277, %v2276
    %v2315 = vpack.c.bf16 %v2279, %v2278
    %v2316 = vpack.c.bf16 %v2281, %v2280
    %v2317 = vpack.c.bf16 %v2283, %v2282
    %v2320 = vunpack.c.l.s4 1966171168
    %v2321 = vunpack.c.0.s8 %v2320
    %v2322 = vlaneseq
    %v2323 = vshrl.u32 %v2322, 7
    %v2324 = vsub.s32 %v2321, %v2323
    %v2325 = vrot.slane %v2301, %v2324
    %v2326 = vcombine.high %v2325, %v2325
    %v2328 = vunpack.c.l.s4 1966171168
    %v2329 = vunpack.c.0.s8 %v2328
    %v2330 = vlaneseq
    %v2331 = vshrl.u32 %v2330, 7
    %v2332 = vsub.s32 %v2329, %v2331
    %v2333 = vrot.slane %v2325, %v2332
    %v2335 = vunpack.c.l.s4 1966171168
    %v2336 = vunpack.c.0.s8 %v2335
    %v2337 = vlaneseq
    %v2338 = vshrl.u32 %v2337, 7
    %v2339 = vsub.s32 %v2336, %v2338
    %v2340 = vrot.slane %v2326, %v2339
    %2343 = vmatprep.subr.bf16.mxu0 0
    %2344 = vmatpush1.bf16.msra.mxu0 %v2302
    %2345 = vmatprep.subr.bf16.mxu0 0
    %2346 = vmatpush1.bf16.msra.mxu0 %v2303
    %2347 = vmatprep.subr.bf16.mxu0 0
    %2348 = vmatpush1.bf16.msra.mxu0 %v2304
    %2349 = vmatprep.subr.bf16.mxu0 0
    %2350 = vmatpush1.bf16.msra.mxu0 %v2305
    %2351 = vmatprep.subr.bf16.mxu0 0
    %2352 = vmatpush1.bf16.msra.mxu0 %v2306
    %2353 = vmatprep.subr.bf16.mxu0 0
    %2354 = vmatpush1.bf16.msra.mxu0 %v2307
    %2355 = vmatprep.subr.bf16.mxu0 0
    %2356 = vmatpush1.bf16.msra.mxu0 %v2308
    %2357 = vmatprep.subr.bf16.mxu0 0
    %2358 = vmatpush1.bf16.msra.mxu0 %v2309
    %2359 = vmatprep.subr.bf16.mxu0 0
    %2360 = vmatpush1.bf16.msra.mxu0 %v2310
    %2361 = vmatprep.subr.bf16.mxu0 0
    %2362 = vmatpush1.bf16.msra.mxu0 %v2311
    %2363 = vmatprep.subr.bf16.mxu0 0
    %2364 = vmatpush1.bf16.msra.mxu0 %v2312
    %2365 = vmatprep.subr.bf16.mxu0 0
    %2366 = vmatpush1.bf16.msra.mxu0 %v2313
    %2367 = vmatprep.subr.bf16.mxu0 0
    %2368 = vmatpush1.bf16.msra.mxu0 %v2314
    %2369 = vmatprep.subr.bf16.mxu0 0
    %2370 = vmatpush1.bf16.msra.mxu0 %v2315
    %2371 = vmatprep.subr.bf16.mxu0 0
    %2372 = vmatpush1.bf16.msra.mxu0 %v2316
    %2373 = vmatprep.subr.bf16.mxu0 0
    %2374 = vmatpush1.bf16.msra.mxu0 %v2317
    %2375 = vmatprep.mubr.bf16.mxu0 %v2340
    %2376 = vmatmul.mubr.bf16.gmra.mrb[0].mxu0 %v2333
    %v2377 = vpop.f32.mrb[0].mxu0
    %v2378 = vadd.f32 0.0, %v2377
    %v2379 = vpop.f32.mrb[0].mxu0
    %v2380 = vpop.f32.mrb[0].mxu0
    %v2381 = vpop.f32.mrb[0].mxu0
    %2382 = vdwg.mxu0
    %v2385 = vunpack.c.l.s4 1966171168
    %v2386 = vunpack.c.0.s8 %v2385
    %v2387 = vlaneseq
    %v2388 = vshrl.u32 %v2387, 7
    %v2389 = vsub.s32 %v2386, %v2388
    %v2390 = vrot.slane %v2284, %v2389
    %v2391 = vcombine.high %v2390, %v2390
    %v2393 = vunpack.c.l.s4 1966171168
    %v2394 = vunpack.c.0.s8 %v2393
    %v2395 = vlaneseq
    %v2396 = vshrl.u32 %v2395, 7
    %v2397 = vsub.s32 %v2394, %v2396
    %v2398 = vrot.slane %v2390, %v2397
    %v2400 = vunpack.c.l.s4 1966171168
    %v2401 = vunpack.c.0.s8 %v2400
    %v2402 = vlaneseq
    %v2403 = vshrl.u32 %v2402, 7
    %v2404 = vsub.s32 %v2401, %v2403
    %v2405 = vrot.slane %v2391, %v2404
    %2408 = vmatprep.subr.bf16.mxu0 0
    %2409 = vmatpush1.bf16.msra.mxu0 %v2285
    %2410 = vmatprep.subr.bf16.mxu0 0
    %2411 = vmatpush1.bf16.msra.mxu0 %v2286
    %2412 = vmatprep.subr.bf16.mxu0 0
    %2413 = vmatpush1.bf16.msra.mxu0 %v2287
    %2414 = vmatprep.subr.bf16.mxu0 0
    %2415 = vmatpush1.bf16.msra.mxu0 %v2288
    %2416 = vmatprep.subr.bf16.mxu0 0
    %2417 = vmatpush1.bf16.msra.mxu0 %v2289
    %2418 = vmatprep.subr.bf16.mxu0 0
    %2419 = vmatpush1.bf16.msra.mxu0 %v2290
    %2420 = vmatprep.subr.bf16.mxu0 0
    %2421 = vmatpush1.bf16.msra.mxu0 %v2291
    %2422 = vmatprep.subr.bf16.mxu0 0
    %2423 = vmatpush1.bf16.msra.mxu0 %v2292
    %2424 = vmatprep.subr.bf16.mxu0 0
    %2425 = vmatpush1.bf16.msra.mxu0 %v2293
    %2426 = vmatprep.subr.bf16.mxu0 0
    %2427 = vmatpush1.bf16.msra.mxu0 %v2294
    %2428 = vmatprep.subr.bf16.mxu0 0
    %2429 = vmatpush1.bf16.msra.mxu0 %v2295
    %2430 = vmatprep.subr.bf16.mxu0 0
    %2431 = vmatpush1.bf16.msra.mxu0 %v2296
    %2432 = vmatprep.subr.bf16.mxu0 0
    %2433 = vmatpush1.bf16.msra.mxu0 %v2297
    %2434 = vmatprep.subr.bf16.mxu0 0
    %2435 = vmatpush1.bf16.msra.mxu0 %v2298
    %2436 = vmatprep.subr.bf16.mxu0 0
    %2437 = vmatpush1.bf16.msra.mxu0 %v2299
    %2438 = vmatprep.subr.bf16.mxu0 0
    %2439 = vmatpush1.bf16.msra.mxu0 %v2300
    %2440 = vmatprep.mubr.bf16.mxu0 %v2405
    %2441 = vmatmul.mubr.bf16.gmra.mrb[0].mxu0 %v2398
    %v2442 = vpop.f32.mrb[0].mxu0
    %v2443 = vadd.f32 %v2378, %v2442
    %v2444 = vpop.f32.mrb[0].mxu0
    %v2445 = vpop.f32.mrb[0].mxu0
    %v2446 = vpop.f32.mrb[0].mxu0
    %2447 = vdwg.mxu0
    %v2448 = vld [vmem:[%s9] sm:$0x3]
    %2450 = vset.pattern.permute.xlu0 0
    %2451 = vperm.xlu0 %2450, %v2448
    %v2452 = vpop.permute.xlu0 %2451
    %v2454 = vadd.f32 %v2443, %v2452
    %vm2455 = vcmask 58368
    %2456 = vst.msk [vmem:[#allocation2] sm:$0x3] %vm2455, %v2454
    // Predicated region
    $region42: #{tpu_custom_call.1} parent=1 // pred_check
      _
    $region43: #{tpu_custom_call.1} parent=1 // pred_check_branch
      %2458 = sbr.rel (0) target = $region45
    $region44: #{tpu_custom_call.1} parent=1 // pred_region
      %s2460 = ssub.s32 32, 32
      %2461 = vsyncadd [#allocation3], %s2460
      %s2463 = sshll.u32 [#allocation2], 4
      %s2464 = int_to_ptr.vmem [resolvable:$true] %s2463
      %2466 = dma.vmem_to_hbm [thread:$0]  %s2464, 32, %s10, [#allocation3]
    $region45: #{tpu_custom_call.1} parent=1 // pred_fallthru
      _
    // Predicated region
    $region46: #{tpu_custom_call.1} parent=1 // pred_check
      _
    $region47: #{tpu_custom_call.1} parent=1 // pred_check_branch
      %2468 = sbr.rel (0) target = $region49
    $region48: #{tpu_custom_call.1} parent=1 // pred_region
      %2469 = dma.done [#allocation3], 32
    $region49: #{tpu_custom_call.1} parent=1 // pred_fallthru
      _
    %2470 = vsyncpa [#allocation3], 1

</llo_original>
